<compile_context>
chip_gen: v7x
topology: tpu7x:2x2x1
jax: 0.10.0
libtpu: 0.0.40
codegen_flags: <defaults>
</compile_context>

<pallas_src>
import jax
import jax.numpy as jnp
from jax.experimental import pallas as pl
from jax.experimental.pallas import tpu as pltpu


def _round_up(x, m):
    return (x + m - 1) // m * m


def _pick_row_tile(N, h, d, row_tile):
    # bf16 row-tile granularity (16-row sublane packing); also satisfies f32's 8.
    g = 16
    hd = h * d
    # Rough live-VMEM per row: three bf16 (rt, h*d) temporaries + one transient
    # f32 copy during the cast + double-buffered row blocks.  Budgeted against
    # ~12 MiB so the kernel stays well inside v7x's 64 MiB physical VMEM.
    bytes_per_row = 10 * hd + 8 * (2 * h + d)
    rt_cap = max(g, min(_round_up(row_tile, g),
                        (12 * 1024 * 1024 // bytes_per_row) // g * g))
    # Prefer >= 2 grid steps where the input allows it so v7x's two TensorCores
    # both get work on the "parallel" grid axis (no effect on v5e/v6e, 1 TC).
    n_g = _round_up(max(N, 1), g)
    two_step = max(g, _round_up(n_g // 2, g))
    return min(rt_cap, two_step)


def shared_attention_kernel(ori_ref, fro_ref, src_ref,
                            e_ref, t_ref, w_flat_ref, b_bil_ref,
                            w_fc_src_ref, w_fc_x_ref, b_fc_ref,
                            gamma_ref, beta_ref, out_ref):
    f32 = jnp.float32
    mm = jnp.bfloat16   # MXU operand / big-intermediate dtype; accumulation is f32

    fro_f32 = fro_ref[...]              # (TR, d) f32 -- gate uses it unrounded
    fro_bf = fro_f32.astype(mm)

    # ---- Bilinear in the lane-dense (TR, h*d) layout (no relayouts):
    #   M[n, i*d + j] = ori[n, i] * fro[n, j]
    #   corr[n, k]    = sum_{i,j} M[n, i*d+j] * W_bil[k, i, j] + b[k]
    # Replications are 0/1 MXU matmuls; a/f/g stay bf16 so the big (TR, h*d)
    # tensors cost half the vld/vst bytes and VMEM of an f32 layout.
    a = jnp.dot(ori_ref[...], e_ref[...],
                preferred_element_type=f32).astype(mm)            # (TR, h*d): ori[n,i]
    f = jnp.dot(fro_bf, t_ref[...],
                preferred_element_type=f32).astype(mm)            # (TR, h*d): fro[n,j]
    g = a * f                                                     # bf16 VPU multiply
    corr = jnp.dot(g, w_flat_ref[...],
                   preferred_element_type=f32) + b_bil_ref[...]   # (TR, d), K = h*d

    # ---- sigmoid gate (f32, un-rounded fro)
    x1 = jax.nn.sigmoid(corr) * fro_f32                           # (TR, d)

    # ---- fc on [source | x1]: split weight halves, no 96-lane concat/relayout
    pre = (jnp.dot(src_ref[...], w_fc_src_ref[...], preferred_element_type=f32)
           + jnp.dot(x1.astype(mm), w_fc_x_ref[...], preferred_element_type=f32)
           + b_fc_ref[...])                                       # (TR, h)
    x2 = jax.nn.sigmoid(pre)

    # ---- LayerNorm(h, eps=0, elementwise_affine=True) -- eps=0 matches the module
    mu = jnp.mean(x2, axis=-1, keepdims=True)
    var = jnp.mean((x2 - mu) ** 2, axis=-1, keepdims=True)
    y = (x2 - mu) * jax.lax.rsqrt(var + 0.0) * gamma_ref[...] + beta_ref[...]

    # TODO(synk): h=32-lane masked output vst; packing 4 rows per 128-lane slab
    # (out viewed as (N/4, 4h)) would give unmasked stores at the cost of an
    # in-kernel (TR,h)->(TR/4,4h) relayout -- modest win here, intentionally left out.
    out_ref[...] = y.astype(out_ref.dtype)


def prepare_shared_attention_params(W_bil, b_bil, W_fc, b_fc, gamma, beta):
    """One-time constant prep, hoisted out of the per-call path (review item)."""
    d, h, d2 = W_bil.shape
    assert d == d2, "nn.Bilinear(h, d, d) weight must be (d, h, d)"
    f32, mm = jnp.float32, jnp.bfloat16
    hd = h * d
    # E[i', i*d + j] = (i' == i)   -> (ori @ E)[n, i*d+j] = ori[n, i]
    e_rep = jnp.repeat(jnp.eye(h, dtype=f32), d, axis=1).astype(mm)        # (h, hd)
    # T[j', i*d + j] = (j' == j)   -> (fro @ T)[n, i*d+j] = fro[n, j]
    t_rep = jnp.tile(jnp.eye(d, dtype=f32), (1, h)).astype(mm)             # (d, hd)
    # W_flat[i*d + j, k] = W_bil[k, i, j]
    w_flat = jnp.transpose(W_bil, (1, 2, 0)).reshape(hd, d).astype(mm)     # (hd, d)
    return dict(
        h=h, d=d,
        e_rep=e_rep, t_rep=t_rep, w_flat=w_flat,
        b_bil=b_bil.reshape(1, d).astype(f32),
        w_fc_src=W_fc[:, :h].T.astype(mm),     # (h, h): source half of fc
        w_fc_x=W_fc[:, h:].T.astype(mm),       # (d, h): gated-x half of fc
        b_fc=b_fc.reshape(1, h).astype(f32),
        gamma=gamma.reshape(1, h).astype(f32),
        beta=beta.reshape(1, h).astype(f32),
    )


def shared_attention(source, fro, ori, params, *, row_tile=256,
                     vmem_limit_bytes=32 * 1024 * 1024):
    """source/ori: (B,S,h), fro: (B,S,d). Returns (B,S,h)."""
    B, S, h = source.shape
    d = fro.shape[-1]
    assert params["h"] == h and params["d"] == d
    N = B * S
    mm = jnp.bfloat16

    rt = _pick_row_tile(N, h, d, row_tile)
    N_pad = _round_up(N, rt)

    src2 = source.reshape(N, h).astype(mm)   # only feeds a bf16 matmul operand
    ori2 = ori.reshape(N, h).astype(mm)      # only feeds a bf16 matmul operand
    fro2 = fro.reshape(N, d)                 # stays f32 (gate uses it unrounded)
    if N_pad != N:
        pad = ((0, N_pad - N), (0, 0))
        src2 = jnp.pad(src2, pad)
        ori2 = jnp.pad(ori2, pad)
        fro2 = jnp.pad(fro2, pad)

    hd = h * d
    grid = (N_pad // rt,)
    full = lambda i: (0, 0)
    row = lambda i: (i, 0)

    out = pl.pallas_call(
        shared_attention_kernel,
        out_shape=jax.ShapeDtypeStruct((N_pad, h), source.dtype),
        grid_spec=pltpu.PrefetchScalarGridSpec(
            num_scalar_prefetch=0,
            grid=grid,
            in_specs=[
                pl.BlockSpec((rt, h), row),       # ori   (bf16)
                pl.BlockSpec((rt, d), row),       # fro   (f32)
                pl.BlockSpec((rt, h), row),       # source (bf16)
                pl.BlockSpec((h, hd), full),      # E replicator       (bf16)
                pl.BlockSpec((d, hd), full),      # T replicator       (bf16)
                pl.BlockSpec((hd, d), full),      # W_flat bilinear    (bf16)
                pl.BlockSpec((1, d), full),       # bilinear bias
                pl.BlockSpec((h, h), full),       # fc weight, source half (bf16)
                pl.BlockSpec((d, h), full),       # fc weight, x half      (bf16)
                pl.BlockSpec((1, h), full),       # fc bias
                pl.BlockSpec((1, h), full),       # LN gamma
                pl.BlockSpec((1, h), full),       # LN beta
            ],
            out_specs=pl.BlockSpec((rt, h), row),
        ),
        compiler_params=pltpu.CompilerParams(
            dimension_semantics=("parallel",),
            vmem_limit_bytes=vmem_limit_bytes),
    )(ori2, fro2, src2,
      params["e_rep"], params["t_rep"], params["w_flat"], params["b_bil"],
      params["w_fc_src"], params["w_fc_x"], params["b_fc"],
      params["gamma"], params["beta"])

    return out[:N].reshape(B, S, h)


def reference_forward(source, fro, ori, W_bil, b_bil, W_fc, b_fc, gamma, beta):
    corr = jnp.einsum('bsi,kij,bsj->bsk', ori, W_bil, fro) + b_bil
    x = jax.nn.sigmoid(corr) * fro
    cat = jnp.concatenate([source, x], axis=2)
    x = jax.nn.sigmoid(cat @ W_fc.T + b_fc)
    mu = x.mean(-1, keepdims=True)
    var = ((x - mu) ** 2).mean(-1, keepdims=True)
    return (x - mu) / jnp.sqrt(var + 0.0) * gamma + beta


def _run_case(B, S, h, d_model):
    key = jax.random.PRNGKey(0)
    ks = jax.random.split(key, 9)

    source = jax.random.normal(ks[0], (B, S, h), jnp.float32)
    fro = jax.random.normal(ks[1], (B, S, d_model), jnp.float32)
    ori = jax.random.normal(ks[2], (B, S, h), jnp.float32)

    # Synthetic parameters with the same shapes as the PyTorch module.
    W_bil = 0.1 * jax.random.normal(ks[3], (d_model, h, d_model), jnp.float32)
    b_bil = 0.1 * jax.random.normal(ks[4], (d_model,), jnp.float32)
    W_fc = 0.1 * jax.random.normal(ks[5], (h, h + d_model), jnp.float32)
    b_fc = 0.1 * jax.random.normal(ks[6], (h,), jnp.float32)
    gamma = 1.0 + 0.05 * jax.random.normal(ks[7], (h,), jnp.float32)
    beta = 0.05 * jax.random.normal(ks[8], (h,), jnp.float32)

    params = prepare_shared_attention_params(W_bil, b_bil, W_fc, b_fc, gamma, beta)
    out = shared_attention(source, fro, ori, params)
    out = jax.block_until_ready(out)

    ref = reference_forward(source, fro, ori, W_bil, b_bil, W_fc, b_fc,
                            gamma, beta)
    assert out.shape == (B, S, h)
    err = float(jnp.max(jnp.abs(out - ref)))
    # bf16 MXU operands (f32 accumulation) over an h*d-term contraction, plus the
    # LayerNorm 1/sigma amplification, vs the pure-f32 reference -> relaxed tol.
    assert jnp.allclose(out, ref, rtol=5e-2, atol=1e-1), err


if __name__ == "__main__":
    _run_case(B=2, S=8, h=32, d_model=32)   # h == d, exact row-tile multiple
    _run_case(B=2, S=9, h=32, d_model=64)   # h != d, exercises padded tail + 2-step grid
    print("KERNEL_OK")
</pallas_src>

<mosaic_0001>
module attributes {stable_mosaic.version = 11 : i64} {
  func.func @shared_attention_kernel(%arg0: i32, %arg1: memref<16x32xbf16, #tpu.memory_space<vmem>>, %arg2: memref<16x32xf32, #tpu.memory_space<vmem>>, %arg3: memref<16x32xbf16, #tpu.memory_space<vmem>>, %arg4: memref<32x1024xbf16, #tpu.memory_space<vmem>>, %arg5: memref<32x1024xbf16, #tpu.memory_space<vmem>>, %arg6: memref<1024x32xbf16, #tpu.memory_space<vmem>>, %arg7: memref<1x32xf32, #tpu.memory_space<vmem>>, %arg8: memref<32x32xbf16, #tpu.memory_space<vmem>>, %arg9: memref<32x32xbf16, #tpu.memory_space<vmem>>, %arg10: memref<1x32xf32, #tpu.memory_space<vmem>>, %arg11: memref<1x32xf32, #tpu.memory_space<vmem>>, %arg12: memref<1x32xf32, #tpu.memory_space<vmem>>, %arg13: memref<16x32xf32, #tpu.memory_space<vmem>>) attributes {dimension_semantics = [#tpu.dimension_semantics<parallel>], iteration_bounds = array<i64: 1>, scalar_prefetch = 0 : i64, scratch_operands = 0 : i64, tpu.core_type = #tpu.core_type<tc>, window_params = [{transform_indices = @transform_0, window_bounds = array<i64: 16, 32>}, {transform_indices = @transform_1, window_bounds = array<i64: 16, 32>}, {transform_indices = @transform_2, window_bounds = array<i64: 16, 32>}, {pipeline_mode = #tpu.pipeline_mode<synchronous>, transform_indices = @transform_3, window_bounds = array<i64: 32, 1024>}, {pipeline_mode = #tpu.pipeline_mode<synchronous>, transform_indices = @transform_4, window_bounds = array<i64: 32, 1024>}, {pipeline_mode = #tpu.pipeline_mode<synchronous>, transform_indices = @transform_5, window_bounds = array<i64: 1024, 32>}, {pipeline_mode = #tpu.pipeline_mode<synchronous>, transform_indices = @transform_6, window_bounds = array<i64: 1, 32>}, {pipeline_mode = #tpu.pipeline_mode<synchronous>, transform_indices = @transform_7, window_bounds = array<i64: 32, 32>}, {pipeline_mode = #tpu.pipeline_mode<synchronous>, transform_indices = @transform_8, window_bounds = array<i64: 32, 32>}, {pipeline_mode = #tpu.pipeline_mode<synchronous>, transform_indices = @transform_9, window_bounds = array<i64: 1, 32>}, {pipeline_mode = #tpu.pipeline_mode<synchronous>, transform_indices = @transform_10, window_bounds = array<i64: 1, 32>}, {pipeline_mode = #tpu.pipeline_mode<synchronous>, transform_indices = @transform_11, window_bounds = array<i64: 1, 32>}, {transform_indices = @transform_12, window_bounds = array<i64: 16, 32>}]} {
    %c0 = arith.constant 0 : index
    %c0_0 = arith.constant 0 : index
    %0 = vector.load %arg2[%c0, %c0_0] : memref<16x32xf32, #tpu.memory_space<vmem>>, vector<16x32xf32>
    %1 = arith.truncf %0 : vector<16x32xf32> to vector<16x32xbf16>
    %c0_1 = arith.constant 0 : index
    %c0_2 = arith.constant 0 : index
    %2 = vector.load %arg1[%c0_1, %c0_2] : memref<16x32xbf16, #tpu.memory_space<vmem>>, vector<16x32xbf16>
    %c0_3 = arith.constant 0 : index
    %c0_4 = arith.constant 0 : index
    %3 = vector.load %arg4[%c0_3, %c0_4] : memref<32x1024xbf16, #tpu.memory_space<vmem>>, vector<32x1024xbf16>
    %cst = arith.constant dense<0.000000e+00> : vector<16x1024xf32>
    %4 = tpu.matmul %2, %3, %cst {dimension_numbers = #tpu.dot_dimension_numbers<[1], [0], [0], [1], [0, 0, 1, 1], [], []>} : vector<16x32xbf16>, vector<32x1024xbf16>, vector<16x1024xf32> -> vector<16x1024xf32>
    %5 = arith.truncf %4 : vector<16x1024xf32> to vector<16x1024xbf16>
    %c0_5 = arith.constant 0 : index
    %c0_6 = arith.constant 0 : index
    %6 = vector.load %arg5[%c0_5, %c0_6] : memref<32x1024xbf16, #tpu.memory_space<vmem>>, vector<32x1024xbf16>
    %cst_7 = arith.constant dense<0.000000e+00> : vector<16x1024xf32>
    %7 = tpu.matmul %1, %6, %cst_7 {dimension_numbers = #tpu.dot_dimension_numbers<[1], [0], [0], [1], [0, 0, 1, 1], [], []>} : vector<16x32xbf16>, vector<32x1024xbf16>, vector<16x1024xf32> -> vector<16x1024xf32>
    %8 = arith.truncf %7 : vector<16x1024xf32> to vector<16x1024xbf16>
    %9 = arith.mulf %5, %8 : vector<16x1024xbf16>
    %c0_8 = arith.constant 0 : index
    %c0_9 = arith.constant 0 : index
    %10 = vector.load %arg6[%c0_8, %c0_9] : memref<1024x32xbf16, #tpu.memory_space<vmem>>, vector<1024x32xbf16>
    %cst_10 = arith.constant dense<0.000000e+00> : vector<16x32xf32>
    %11 = tpu.matmul %9, %10, %cst_10 {dimension_numbers = #tpu.dot_dimension_numbers<[1], [0], [0], [1], [0, 0, 1, 1], [], []>} : vector<16x1024xbf16>, vector<1024x32xbf16>, vector<16x32xf32> -> vector<16x32xf32>
    %c0_11 = arith.constant 0 : index
    %c0_12 = arith.constant 0 : index
    %12 = vector.load %arg7[%c0_11, %c0_12] : memref<1x32xf32, #tpu.memory_space<vmem>>, vector<1x32xf32>
    %13 = vector.broadcast %12 : vector<1x32xf32> to vector<16x32xf32>
    %14 = arith.addf %11, %13 : vector<16x32xf32>
    %15 = arith.negf %14 : vector<16x32xf32>
    %16 = math.exp %15 : vector<16x32xf32>
    %cst_13 = arith.constant 1.000000e+00 : f32
    %17 = vector.broadcast %cst_13 : f32 to vector<16x32xf32>
    %18 = arith.addf %17, %16 : vector<16x32xf32>
    %19 = arith.divf %17, %18 : vector<16x32xf32>
    %20 = arith.mulf %19, %0 : vector<16x32xf32>
    %c0_14 = arith.constant 0 : index
    %c0_15 = arith.constant 0 : index
    %21 = vector.load %arg3[%c0_14, %c0_15] : memref<16x32xbf16, #tpu.memory_space<vmem>>, vector<16x32xbf16>
    %c0_16 = arith.constant 0 : index
    %c0_17 = arith.constant 0 : index
    %22 = vector.load %arg8[%c0_16, %c0_17] : memref<32x32xbf16, #tpu.memory_space<vmem>>, vector<32x32xbf16>
    %cst_18 = arith.constant dense<0.000000e+00> : vector<16x32xf32>
    %23 = tpu.matmul %21, %22, %cst_18 {dimension_numbers = #tpu.dot_dimension_numbers<[1], [0], [0], [1], [0, 0, 1, 1], [], []>} : vector<16x32xbf16>, vector<32x32xbf16>, vector<16x32xf32> -> vector<16x32xf32>
    %24 = arith.truncf %20 : vector<16x32xf32> to vector<16x32xbf16>
    %c0_19 = arith.constant 0 : index
    %c0_20 = arith.constant 0 : index
    %25 = vector.load %arg9[%c0_19, %c0_20] : memref<32x32xbf16, #tpu.memory_space<vmem>>, vector<32x32xbf16>
    %cst_21 = arith.constant dense<0.000000e+00> : vector<16x32xf32>
    %26 = tpu.matmul %24, %25, %cst_21 {dimension_numbers = #tpu.dot_dimension_numbers<[1], [0], [0], [1], [0, 0, 1, 1], [], []>} : vector<16x32xbf16>, vector<32x32xbf16>, vector<16x32xf32> -> vector<16x32xf32>
    %27 = arith.addf %23, %26 : vector<16x32xf32>
    %c0_22 = arith.constant 0 : index
    %c0_23 = arith.constant 0 : index
    %28 = vector.load %arg10[%c0_22, %c0_23] : memref<1x32xf32, #tpu.memory_space<vmem>>, vector<1x32xf32>
    %29 = vector.broadcast %28 : vector<1x32xf32> to vector<16x32xf32>
    %30 = arith.addf %27, %29 : vector<16x32xf32>
    %31 = arith.negf %30 : vector<16x32xf32>
    %32 = math.exp %31 : vector<16x32xf32>
    %cst_24 = arith.constant 1.000000e+00 : f32
    %33 = vector.broadcast %cst_24 : f32 to vector<16x32xf32>
    %34 = arith.addf %33, %32 : vector<16x32xf32>
    %35 = arith.divf %33, %34 : vector<16x32xf32>
    %cst_25 = arith.constant dense<0.000000e+00> : vector<16xf32>
    %36 = vector.multi_reduction <add>, %35, %cst_25 [1] : vector<16x32xf32> to vector<16xf32>
    %37 = vector.shape_cast %36 : vector<16xf32> to vector<16x1xf32>
    %cst_26 = arith.constant 3.200000e+01 : f32
    %38 = vector.broadcast %cst_26 : f32 to vector<16x1xf32>
    %39 = arith.divf %37, %38 : vector<16x1xf32>
    %40 = vector.broadcast %39 : vector<16x1xf32> to vector<16x32xf32>
    %41 = arith.subf %35, %40 : vector<16x32xf32>
    %42 = arith.mulf %41, %41 : vector<16x32xf32>
    %cst_27 = arith.constant dense<0.000000e+00> : vector<16xf32>
    %43 = vector.multi_reduction <add>, %42, %cst_27 [1] : vector<16x32xf32> to vector<16xf32>
    %44 = vector.shape_cast %43 : vector<16xf32> to vector<16x1xf32>
    %cst_28 = arith.constant 3.200000e+01 : f32
    %45 = vector.broadcast %cst_28 : f32 to vector<16x1xf32>
    %46 = arith.divf %44, %45 : vector<16x1xf32>
    %47 = vector.broadcast %39 : vector<16x1xf32> to vector<16x32xf32>
    %48 = arith.subf %35, %47 : vector<16x32xf32>
    %cst_29 = arith.constant 0.000000e+00 : f32
    %49 = vector.broadcast %cst_29 : f32 to vector<16x1xf32>
    %50 = arith.addf %46, %49 : vector<16x1xf32>
    %51 = math.rsqrt %50 : vector<16x1xf32>
    %52 = vector.broadcast %51 : vector<16x1xf32> to vector<16x32xf32>
    %53 = arith.mulf %48, %52 : vector<16x32xf32>
    %c0_30 = arith.constant 0 : index
    %c0_31 = arith.constant 0 : index
    %54 = vector.load %arg11[%c0_30, %c0_31] : memref<1x32xf32, #tpu.memory_space<vmem>>, vector<1x32xf32>
    %55 = vector.broadcast %54 : vector<1x32xf32> to vector<16x32xf32>
    %56 = arith.mulf %53, %55 : vector<16x32xf32>
    %c0_32 = arith.constant 0 : index
    %c0_33 = arith.constant 0 : index
    %57 = vector.load %arg12[%c0_32, %c0_33] : memref<1x32xf32, #tpu.memory_space<vmem>>, vector<1x32xf32>
    %58 = vector.broadcast %57 : vector<1x32xf32> to vector<16x32xf32>
    %59 = arith.addf %56, %58 : vector<16x32xf32>
    %c0_34 = arith.constant 0 : index
    %c0_35 = arith.constant 0 : index
    %60 = vector.load %arg13[%c0_34, %c0_35] : memref<16x32xf32, #tpu.memory_space<vmem>>, vector<16x32xf32>
    tpu.vector_store %arg13[%c0_34, %c0_35], %59 {strides = array<i32>} : memref<16x32xf32, #tpu.memory_space<vmem>>, vector<16x32xf32>,
    return
  }
  func.func @transform_0(%arg0: i32) -> (i32, i32) {
    %c0_i32 = arith.constant 0 : i32
    %c0_i32_0 = arith.constant 0 : i32
    return %arg0, %c0_i32 : i32, i32
  }
  func.func @transform_1(%arg0: i32) -> (i32, i32) {
    %c0_i32 = arith.constant 0 : i32
    %c0_i32_0 = arith.constant 0 : i32
    return %arg0, %c0_i32 : i32, i32
  }
  func.func @transform_2(%arg0: i32) -> (i32, i32) {
    %c0_i32 = arith.constant 0 : i32
    %c0_i32_0 = arith.constant 0 : i32
    return %arg0, %c0_i32 : i32, i32
  }
  func.func @transform_3(%arg0: i32) -> (i32, i32) {
    %c0_i32 = arith.constant 0 : i32
    %c0_i32_0 = arith.constant 0 : i32
    %c0_i32_1 = arith.constant 0 : i32
    return %c0_i32, %c0_i32_0 : i32, i32
  }
  func.func @transform_4(%arg0: i32) -> (i32, i32) {
    %c0_i32 = arith.constant 0 : i32
    %c0_i32_0 = arith.constant 0 : i32
    %c0_i32_1 = arith.constant 0 : i32
    return %c0_i32, %c0_i32_0 : i32, i32
  }
  func.func @transform_5(%arg0: i32) -> (i32, i32) {
    %c0_i32 = arith.constant 0 : i32
    %c0_i32_0 = arith.constant 0 : i32
    %c0_i32_1 = arith.constant 0 : i32
    return %c0_i32, %c0_i32_0 : i32, i32
  }
  func.func @transform_6(%arg0: i32) -> (i32, i32) {
    %c0_i32 = arith.constant 0 : i32
    %c0_i32_0 = arith.constant 0 : i32
    %c0_i32_1 = arith.constant 0 : i32
    return %c0_i32, %c0_i32_0 : i32, i32
  }
  func.func @transform_7(%arg0: i32) -> (i32, i32) {
    %c0_i32 = arith.constant 0 : i32
    %c0_i32_0 = arith.constant 0 : i32
    %c0_i32_1 = arith.constant 0 : i32
    return %c0_i32, %c0_i32_0 : i32, i32
  }
  func.func @transform_8(%arg0: i32) -> (i32, i32) {
    %c0_i32 = arith.constant 0 : i32
    %c0_i32_0 = arith.constant 0 : i32
    %c0_i32_1 = arith.constant 0 : i32
    return %c0_i32, %c0_i32_0 : i32, i32
  }
  func.func @transform_9(%arg0: i32) -> (i32, i32) {
    %c0_i32 = arith.constant 0 : i32
    %c0_i32_0 = arith.constant 0 : i32
    %c0_i32_1 = arith.constant 0 : i32
    return %c0_i32, %c0_i32_0 : i32, i32
  }
  func.func @transform_10(%arg0: i32) -> (i32, i32) {
    %c0_i32 = arith.constant 0 : i32
    %c0_i32_0 = arith.constant 0 : i32
    %c0_i32_1 = arith.constant 0 : i32
    return %c0_i32, %c0_i32_0 : i32, i32
  }
  func.func @transform_11(%arg0: i32) -> (i32, i32) {
    %c0_i32 = arith.constant 0 : i32
    %c0_i32_0 = arith.constant 0 : i32
    %c0_i32_1 = arith.constant 0 : i32
    return %c0_i32, %c0_i32_0 : i32, i32
  }
  func.func @transform_12(%arg0: i32) -> (i32, i32) {
    %c0_i32 = arith.constant 0 : i32
    %c0_i32_0 = arith.constant 0 : i32
    return %arg0, %c0_i32 : i32, i32
  }
}

</mosaic_0001>

<llo_original>
// kernel: tpu_custom_call.1
$region0: #{tpu_custom_call.1}
  #allocation0 [shape = 'u32[]', space=smem, size = 0x4, offset = 0x4, fixed_abs, tag = 'smem constant byte address 0x4 - core index']
  #allocation1 [shape = 'u32[144,128]{1,0:T(1,128)}', space=vmem, size = 0x12000, scoped, tag = 'internal scratch']
  %s0 = inlined_call_operand.vmem [shape: bf16[16,32], index: 0, kind: input, shape index: {}]
  %s1 = inlined_call_operand.vmem [shape: f32[16,32], index: 1, kind: input, shape index: {}]
  %s2 = inlined_call_operand.vmem [shape: bf16[16,32], index: 2, kind: input, shape index: {}]
  %s3 = inlined_call_operand.vmem [shape: bf16[32,1024], index: 3, kind: input, shape index: {}]
  %s4 = inlined_call_operand.vmem [shape: bf16[32,1024], index: 4, kind: input, shape index: {}]
  %s5 = inlined_call_operand.vmem [shape: bf16[1024,32], index: 5, kind: input, shape index: {}]
  %s6 = inlined_call_operand.vmem [shape: f32[1,32], index: 6, kind: input, shape index: {}]
  %s7 = inlined_call_operand.vmem [shape: bf16[32,32], index: 7, kind: input, shape index: {}]
  %s8 = inlined_call_operand.vmem [shape: bf16[32,32], index: 8, kind: input, shape index: {}]
  %s9 = inlined_call_operand.vmem [shape: f32[1,32], index: 9, kind: input, shape index: {}]
  %s10 = inlined_call_operand.vmem [shape: f32[1,32], index: 10, kind: input, shape index: {}]
  %s11 = inlined_call_operand.vmem [shape: f32[1,32], index: 11, kind: input, shape index: {}]
  %s12 = inlined_call_operand.hbm [shape: f32[16,32], index: 12, kind: output, shape index: {}]
  %s13 = sld [smem:[#allocation0]]
  $region58: #{tpu_custom_call.1} parent=0
    _
  %s15 = ssub.s32 1, %s13
  %s16 = scalar_select 0, %s15, %s13
  $region1: #{tpu_custom_call.1} parent=0
    #allocation2 [shape = 'u8[8192]{0}', space=vmem, size = 0x2000, scoped, tag = 'output window, operand 0, single buffered']
    #allocation3 [shape = 's32[1]{0}', space=sflag, size = 0x4, scoped, tag = 'scoped memory for tpu_custom_call.1']
    %17 = vsyncpa [#allocation3], 0
    // Predicated region
    $region2: #{tpu_custom_call.1} parent=1 // pred_check
      _
    $region3: #{tpu_custom_call.1} parent=1 // pred_check_branch
      %19 = sbr.rel (0) target = $region5
    $region4: #{tpu_custom_call.1} parent=1 // pred_region
      _
    $region5: #{tpu_custom_call.1} parent=1 // pred_fallthru
      _
    // Predicated region
    $region6: #{tpu_custom_call.1} parent=1 // pred_check
      _
    $region7: #{tpu_custom_call.1} parent=1 // pred_check_branch
      %21 = sbr.rel (0) target = $region9
    $region8: #{tpu_custom_call.1} parent=1 // pred_region
      _
    $region9: #{tpu_custom_call.1} parent=1 // pred_fallthru
      _
    // Predicated region
    $region10: #{tpu_custom_call.1} parent=1 // pred_check
      _
    $region11: #{tpu_custom_call.1} parent=1 // pred_check_branch
      %23 = sbr.rel (0) target = $region13
    $region12: #{tpu_custom_call.1} parent=1 // pred_region
      _
    $region13: #{tpu_custom_call.1} parent=1 // pred_fallthru
      _
    // Predicated region
    $region14: #{tpu_custom_call.1} parent=1 // pred_check
      _
    $region15: #{tpu_custom_call.1} parent=1 // pred_check_branch
      %25 = sbr.rel (0) target = $region17
    $region16: #{tpu_custom_call.1} parent=1 // pred_region
      _
    $region17: #{tpu_custom_call.1} parent=1 // pred_fallthru
      _
    // Predicated region
    $region18: #{tpu_custom_call.1} parent=1 // pred_check
      _
    $region19: #{tpu_custom_call.1} parent=1 // pred_check_branch
      %27 = sbr.rel (0) target = $region21
    $region20: #{tpu_custom_call.1} parent=1 // pred_region
      _
    $region21: #{tpu_custom_call.1} parent=1 // pred_fallthru
      _
    // Predicated region
    $region22: #{tpu_custom_call.1} parent=1 // pred_check
      _
    $region23: #{tpu_custom_call.1} parent=1 // pred_check_branch
      %29 = sbr.rel (0) target = $region25
    $region24: #{tpu_custom_call.1} parent=1 // pred_region
      _
    $region25: #{tpu_custom_call.1} parent=1 // pred_fallthru
      _
    // Predicated region
    $region26: #{tpu_custom_call.1} parent=1 // pred_check
      _
    $region27: #{tpu_custom_call.1} parent=1 // pred_check_branch
      %31 = sbr.rel (0) target = $region29
    $region28: #{tpu_custom_call.1} parent=1 // pred_region
      _
    $region29: #{tpu_custom_call.1} parent=1 // pred_fallthru
      _
    // Predicated region
    $region30: #{tpu_custom_call.1} parent=1 // pred_check
      _
    $region31: #{tpu_custom_call.1} parent=1 // pred_check_branch
      %33 = sbr.rel (0) target = $region33
    $region32: #{tpu_custom_call.1} parent=1 // pred_region
      _
    $region33: #{tpu_custom_call.1} parent=1 // pred_fallthru
      _
    // Predicated region
    $region34: #{tpu_custom_call.1} parent=1 // pred_check
      _
    $region35: #{tpu_custom_call.1} parent=1 // pred_check_branch
      %35 = sbr.rel (0) target = $region37
    $region36: #{tpu_custom_call.1} parent=1 // pred_region
      _
    $region37: #{tpu_custom_call.1} parent=1 // pred_fallthru
      _
    // Predicated region
    $region38: #{tpu_custom_call.1} parent=1 // pred_check
      _
    $region39: #{tpu_custom_call.1} parent=1 // pred_check_branch
      %37 = sbr.rel (0) target = $region41
    $region40: #{tpu_custom_call.1} parent=1 // pred_region
      _
    $region41: #{tpu_custom_call.1} parent=1 // pred_fallthru
      _
    // Predicated region
    $region42: #{tpu_custom_call.1} parent=1 // pred_check
      _
    $region43: #{tpu_custom_call.1} parent=1 // pred_check_branch
      %39 = sbr.rel (0) target = $region45
    $region44: #{tpu_custom_call.1} parent=1 // pred_region
      _
    $region45: #{tpu_custom_call.1} parent=1 // pred_fallthru
      _
    // Predicated region
    $region46: #{tpu_custom_call.1} parent=1 // pred_check
      _
    $region47: #{tpu_custom_call.1} parent=1 // pred_check_branch
      %41 = sbr.rel (0) target = $region49
    $region48: #{tpu_custom_call.1} parent=1 // pred_region
      _
    $region49: #{tpu_custom_call.1} parent=1 // pred_fallthru
      _
    %v43 = vld [vmem:[%s1] sm:$0xff]
    %v44 = vld [vmem:[%s1 + $0x8] sm:$0xff]
    %v45 = vpack.c.bf16 %v44, %v43
    %v46 = vld [vmem:[%s0] sm:$0xf]
    %v47 = vld [vmem:[%s0 + $0x4] sm:$0xf]
    %v48 = vld [vmem:[%s3] sm:$0xff]
    %v49 = vld [vmem:[%s3 + $0x8] sm:$0xff]
    %v50 = vld [vmem:[%s3 + $0x10] sm:$0xff]
    %v51 = vld [vmem:[%s3 + $0x18] sm:$0xff]
    %v52 = vld [vmem:[%s3 + $0x20] sm:$0xff]
    %v53 = vld [vmem:[%s3 + $0x28] sm:$0xff]
    %v54 = vld [vmem:[%s3 + $0x30] sm:$0xff]
    %v55 = vld [vmem:[%s3 + $0x38] sm:$0xff]
    %v56 = vld [vmem:[%s3 + $0x40] sm:$0xff]
    %v57 = vld [vmem:[%s3 + $0x48] sm:$0xff]
    %v58 = vld [vmem:[%s3 + $0x50] sm:$0xff]
    %v59 = vld [vmem:[%s3 + $0x58] sm:$0xff]
    %v60 = vld [vmem:[%s3 + $0x60] sm:$0xff]
    %v61 = vld [vmem:[%s3 + $0x68] sm:$0xff]
    %v62 = vld [vmem:[%s3 + $0x70] sm:$0xff]
    %v63 = vld [vmem:[%s3 + $0x78] sm:$0xff]
    %v66 = vunpack.c.l.b16 %v46
    %v67 = vunpack.c.l.b16 %v47
    %v68 = vpack.c.b16 %v67, %v66
    %v85 = vunpack.c.l.b16 %v48
    %v86 = vunpack.c.h.b16 %v48
    %v87 = vunpack.c.l.b16 %v49
    %v88 = vunpack.c.h.b16 %v49
    %v89 = vunpack.c.l.b16 %v50
    %v90 = vunpack.c.h.b16 %v50
    %v91 = vunpack.c.l.b16 %v51
    %v92 = vunpack.c.h.b16 %v51
    %v93 = vunpack.c.l.b16 %v52
    %v94 = vunpack.c.h.b16 %v52
    %v95 = vunpack.c.l.b16 %v53
    %v96 = vunpack.c.h.b16 %v53
    %v97 = vunpack.c.l.b16 %v54
    %v98 = vunpack.c.h.b16 %v54
    %v99 = vunpack.c.l.b16 %v55
    %v100 = vunpack.c.h.b16 %v55
    %v101 = vunpack.c.l.b16 %v56
    %v102 = vunpack.c.h.b16 %v56
    %v103 = vunpack.c.l.b16 %v57
    %v104 = vunpack.c.h.b16 %v57
    %v105 = vunpack.c.l.b16 %v58
    %v106 = vunpack.c.h.b16 %v58
    %v107 = vunpack.c.l.b16 %v59
    %v108 = vunpack.c.h.b16 %v59
    %v109 = vunpack.c.l.b16 %v60
    %v110 = vunpack.c.h.b16 %v60
    %v111 = vunpack.c.l.b16 %v61
    %v112 = vunpack.c.h.b16 %v61
    %v113 = vunpack.c.l.b16 %v62
    %v114 = vunpack.c.h.b16 %v62
    %v115 = vunpack.c.l.b16 %v63
    %v116 = vunpack.c.h.b16 %v63
    %v117 = vpack.c.b16 %v93, %v85
    %v118 = vpack.c.b16 %v94, %v86
    %v119 = vpack.c.b16 %v95, %v87
    %v120 = vpack.c.b16 %v96, %v88
    %v121 = vpack.c.b16 %v97, %v89
    %v122 = vpack.c.b16 %v98, %v90
    %v123 = vpack.c.b16 %v99, %v91
    %v124 = vpack.c.b16 %v100, %v92
    %v125 = vpack.c.b16 %v109, %v101
    %v126 = vpack.c.b16 %v110, %v102
    %v127 = vpack.c.b16 %v111, %v103
    %v128 = vpack.c.b16 %v112, %v104
    %v129 = vpack.c.b16 %v113, %v105
    %v130 = vpack.c.b16 %v114, %v106
    %v131 = vpack.c.b16 %v115, %v107
    %v132 = vpack.c.b16 %v116, %v108
    %vm149 = vcmask 261120
    %v151 = vsel %vm149, %v68, 0
    %153 = vmatprep.subr.bf16.mxu0 %v118
    %154 = vmatpush1.bf16.msra.mxu0 %v117
    %155 = vmatprep.subr.bf16.mxu0 %v126
    %156 = vmatpush1.bf16.msra.mxu0 %v125
    %157 = vmatprep.subr.bf16.mxu0 0
    %158 = vmatpush1.bf16.msra.mxu0 0
    %159 = vmatprep.subr.bf16.mxu0 0
    %160 = vmatpush1.bf16.msra.mxu0 0
    %161 = vmatprep.subr.bf16.mxu0 0
    %162 = vmatpush1.bf16.msra.mxu0 0
    %163 = vmatprep.subr.bf16.mxu0 0
    %164 = vmatpush1.bf16.msra.mxu0 0
    %165 = vmatprep.subr.bf16.mxu0 0
    %166 = vmatpush1.bf16.msra.mxu0 0
    %167 = vmatprep.subr.bf16.mxu0 0
    %168 = vmatpush1.bf16.msra.mxu0 0
    %169 = vmatprep.subr.bf16.mxu0 0
    %170 = vmatpush1.bf16.msra.mxu0 0
    %171 = vmatprep.subr.bf16.mxu0 0
    %172 = vmatpush1.bf16.msra.mxu0 0
    %173 = vmatprep.subr.bf16.mxu0 0
    %174 = vmatpush1.bf16.msra.mxu0 0
    %175 = vmatprep.subr.bf16.mxu0 0
    %176 = vmatpush1.bf16.msra.mxu0 0
    %177 = vmatprep.subr.bf16.mxu0 0
    %178 = vmatpush1.bf16.msra.mxu0 0
    %179 = vmatprep.subr.bf16.mxu0 0
    %180 = vmatpush1.bf16.msra.mxu0 0
    %181 = vmatprep.subr.bf16.mxu0 0
    %182 = vmatpush1.bf16.msra.mxu0 0
    %183 = vmatprep.subr.bf16.mxu0 0
    %184 = vmatpush1.bf16.msra.mxu0 0
    %185 = vmatprep.mubr.bf16.mxu0 0
    %186 = vmatmul.mubr.bf16.gmra.mrb[0].mxu0 %v151
    %v187 = vpop.f32.mrb[0].mxu0
    %v188 = vadd.f32 0.0, %v187
    %v189 = vpop.f32.mrb[0].mxu0
    %v190 = vadd.f32 0.0, %v189
    %v191 = vpop.f32.mrb[0].mxu0
    %v192 = vadd.f32 0.0, %v191
    %v193 = vpop.f32.mrb[0].mxu0
    %v194 = vadd.f32 0.0, %v193
    %195 = vdwg.mxu0
    %196 = vmatprep.subr.bf16.mxu0 %v120
    %197 = vmatpush1.bf16.msra.mxu0 %v119
    %198 = vmatprep.subr.bf16.mxu0 %v128
    %199 = vmatpush1.bf16.msra.mxu0 %v127
    %200 = vmatprep.subr.bf16.mxu0 0
    %201 = vmatpush1.bf16.msra.mxu0 0
    %202 = vmatprep.subr.bf16.mxu0 0
    %203 = vmatpush1.bf16.msra.mxu0 0
    %204 = vmatprep.subr.bf16.mxu0 0
    %205 = vmatpush1.bf16.msra.mxu0 0
    %206 = vmatprep.subr.bf16.mxu0 0
    %207 = vmatpush1.bf16.msra.mxu0 0
    %208 = vmatprep.subr.bf16.mxu0 0
    %209 = vmatpush1.bf16.msra.mxu0 0
    %210 = vmatprep.subr.bf16.mxu0 0
    %211 = vmatpush1.bf16.msra.mxu0 0
    %212 = vmatprep.subr.bf16.mxu0 0
    %213 = vmatpush1.bf16.msra.mxu0 0
    %214 = vmatprep.subr.bf16.mxu0 0
    %215 = vmatpush1.bf16.msra.mxu0 0
    %216 = vmatprep.subr.bf16.mxu0 0
    %217 = vmatpush1.bf16.msra.mxu0 0
    %218 = vmatprep.subr.bf16.mxu0 0
    %219 = vmatpush1.bf16.msra.mxu0 0
    %220 = vmatprep.subr.bf16.mxu0 0
    %221 = vmatpush1.bf16.msra.mxu0 0
    %222 = vmatprep.subr.bf16.mxu0 0
    %223 = vmatpush1.bf16.msra.mxu0 0
    %224 = vmatprep.subr.bf16.mxu0 0
    %225 = vmatpush1.bf16.msra.mxu0 0
    %226 = vmatprep.subr.bf16.mxu0 0
    %227 = vmatpush1.bf16.msra.mxu0 0
    %228 = vmatprep.mubr.bf16.mxu0 0
    %229 = vmatmul.mubr.bf16.gmra.mrb[0].mxu0 %v151
    %v230 = vpop.f32.mrb[0].mxu0
    %v231 = vadd.f32 0.0, %v230
    %v232 = vpop.f32.mrb[0].mxu0
    %v233 = vadd.f32 0.0, %v232
    %v234 = vpop.f32.mrb[0].mxu0
    %v235 = vadd.f32 0.0, %v234
    %v236 = vpop.f32.mrb[0].mxu0
    %v237 = vadd.f32 0.0, %v236
    %238 = vdwg.mxu0
    %239 = vmatprep.subr.bf16.mxu0 %v122
    %240 = vmatpush1.bf16.msra.mxu0 %v121
    %241 = vmatprep.subr.bf16.mxu0 %v130
    %242 = vmatpush1.bf16.msra.mxu0 %v129
    %243 = vmatprep.subr.bf16.mxu0 0
    %244 = vmatpush1.bf16.msra.mxu0 0
    %245 = vmatprep.subr.bf16.mxu0 0
    %246 = vmatpush1.bf16.msra.mxu0 0
    %247 = vmatprep.subr.bf16.mxu0 0
    %248 = vmatpush1.bf16.msra.mxu0 0
    %249 = vmatprep.subr.bf16.mxu0 0
    %250 = vmatpush1.bf16.msra.mxu0 0
    %251 = vmatprep.subr.bf16.mxu0 0
    %252 = vmatpush1.bf16.msra.mxu0 0
    %253 = vmatprep.subr.bf16.mxu0 0
    %254 = vmatpush1.bf16.msra.mxu0 0
    %255 = vmatprep.subr.bf16.mxu0 0
    %256 = vmatpush1.bf16.msra.mxu0 0
    %257 = vmatprep.subr.bf16.mxu0 0
    %258 = vmatpush1.bf16.msra.mxu0 0
    %259 = vmatprep.subr.bf16.mxu0 0
    %260 = vmatpush1.bf16.msra.mxu0 0
    %261 = vmatprep.subr.bf16.mxu0 0
    %262 = vmatpush1.bf16.msra.mxu0 0
    %263 = vmatprep.subr.bf16.mxu0 0
    %264 = vmatpush1.bf16.msra.mxu0 0
    %265 = vmatprep.subr.bf16.mxu0 0
    %266 = vmatpush1.bf16.msra.mxu0 0
    %267 = vmatprep.subr.bf16.mxu0 0
    %268 = vmatpush1.bf16.msra.mxu0 0
    %269 = vmatprep.subr.bf16.mxu0 0
    %270 = vmatpush1.bf16.msra.mxu0 0
    %271 = vmatprep.mubr.bf16.mxu0 0
    %272 = vmatmul.mubr.bf16.gmra.mrb[0].mxu0 %v151
    %v273 = vpop.f32.mrb[0].mxu0
    %v274 = vadd.f32 0.0, %v273
    %v275 = vpop.f32.mrb[0].mxu0
    %v276 = vadd.f32 0.0, %v275
    %v277 = vpop.f32.mrb[0].mxu0
    %v278 = vadd.f32 0.0, %v277
    %v279 = vpop.f32.mrb[0].mxu0
    %v280 = vadd.f32 0.0, %v279
    %281 = vdwg.mxu0
    %282 = vmatprep.subr.bf16.mxu0 %v124
    %283 = vmatpush1.bf16.msra.mxu0 %v123
    %284 = vmatprep.subr.bf16.mxu0 %v132
    %285 = vmatpush1.bf16.msra.mxu0 %v131
    %286 = vmatprep.subr.bf16.mxu0 0
    %287 = vmatpush1.bf16.msra.mxu0 0
    %288 = vmatprep.subr.bf16.mxu0 0
    %289 = vmatpush1.bf16.msra.mxu0 0
    %290 = vmatprep.subr.bf16.mxu0 0
    %291 = vmatpush1.bf16.msra.mxu0 0
    %292 = vmatprep.subr.bf16.mxu0 0
    %293 = vmatpush1.bf16.msra.mxu0 0
    %294 = vmatprep.subr.bf16.mxu0 0
    %295 = vmatpush1.bf16.msra.mxu0 0
    %296 = vmatprep.subr.bf16.mxu0 0
    %297 = vmatpush1.bf16.msra.mxu0 0
    %298 = vmatprep.subr.bf16.mxu0 0
    %299 = vmatpush1.bf16.msra.mxu0 0
    %300 = vmatprep.subr.bf16.mxu0 0
    %301 = vmatpush1.bf16.msra.mxu0 0
    %302 = vmatprep.subr.bf16.mxu0 0
    %303 = vmatpush1.bf16.msra.mxu0 0
    %304 = vmatprep.subr.bf16.mxu0 0
    %305 = vmatpush1.bf16.msra.mxu0 0
    %306 = vmatprep.subr.bf16.mxu0 0
    %307 = vmatpush1.bf16.msra.mxu0 0
    %308 = vmatprep.subr.bf16.mxu0 0
    %309 = vmatpush1.bf16.msra.mxu0 0
    %310 = vmatprep.subr.bf16.mxu0 0
    %311 = vmatpush1.bf16.msra.mxu0 0
    %312 = vmatprep.subr.bf16.mxu0 0
    %313 = vmatpush1.bf16.msra.mxu0 0
    %314 = vmatprep.mubr.bf16.mxu0 0
    %315 = vmatmul.mubr.bf16.gmra.mrb[0].mxu0 %v151
    %v316 = vpop.f32.mrb[0].mxu0
    %v317 = vadd.f32 0.0, %v316
    %v318 = vpop.f32.mrb[0].mxu0
    %v319 = vadd.f32 0.0, %v318
    %v320 = vpop.f32.mrb[0].mxu0
    %v321 = vadd.f32 0.0, %v320
    %v322 = vpop.f32.mrb[0].mxu0
    %v323 = vadd.f32 0.0, %v322
    %324 = vdwg.mxu0
    %v325 = vpack.c.bf16 %v192, %v188
    %v326 = vpack.c.bf16 %v194, %v190
    %v327 = vpack.c.bf16 %v235, %v231
    %v328 = vpack.c.bf16 %v237, %v233
    %v329 = vpack.c.bf16 %v278, %v274
    %v330 = vpack.c.bf16 %v280, %v276
    %v331 = vpack.c.bf16 %v321, %v317
    %v332 = vpack.c.bf16 %v323, %v319
    %v333 = vld [vmem:[%s4] sm:$0xff]
    %v334 = vld [vmem:[%s4 + $0x8] sm:$0xff]
    %v335 = vld [vmem:[%s4 + $0x10] sm:$0xff]
    %v336 = vld [vmem:[%s4 + $0x18] sm:$0xff]
    %v337 = vld [vmem:[%s4 + $0x20] sm:$0xff]
    %v338 = vld [vmem:[%s4 + $0x28] sm:$0xff]
    %v339 = vld [vmem:[%s4 + $0x30] sm:$0xff]
    %v340 = vld [vmem:[%s4 + $0x38] sm:$0xff]
    %v341 = vld [vmem:[%s4 + $0x40] sm:$0xff]
    %v342 = vld [vmem:[%s4 + $0x48] sm:$0xff]
    %v343 = vld [vmem:[%s4 + $0x50] sm:$0xff]
    %v344 = vld [vmem:[%s4 + $0x58] sm:$0xff]
    %v345 = vld [vmem:[%s4 + $0x60] sm:$0xff]
    %v346 = vld [vmem:[%s4 + $0x68] sm:$0xff]
    %v347 = vld [vmem:[%s4 + $0x70] sm:$0xff]
    %v348 = vld [vmem:[%s4 + $0x78] sm:$0xff]
    %v365 = vunpack.c.l.b16 %v333
    %v366 = vunpack.c.h.b16 %v333
    %v367 = vunpack.c.l.b16 %v334
    %v368 = vunpack.c.h.b16 %v334
    %v369 = vunpack.c.l.b16 %v335
    %v370 = vunpack.c.h.b16 %v335
    %v371 = vunpack.c.l.b16 %v336
    %v372 = vunpack.c.h.b16 %v336
    %v373 = vunpack.c.l.b16 %v337
    %v374 = vunpack.c.h.b16 %v337
    %v375 = vunpack.c.l.b16 %v338
    %v376 = vunpack.c.h.b16 %v338
    %v377 = vunpack.c.l.b16 %v339
    %v378 = vunpack.c.h.b16 %v339
    %v379 = vunpack.c.l.b16 %v340
    %v380 = vunpack.c.h.b16 %v340
    %v381 = vunpack.c.l.b16 %v341
    %v382 = vunpack.c.h.b16 %v341
    %v383 = vunpack.c.l.b16 %v342
    %v384 = vunpack.c.h.b16 %v342
    %v385 = vunpack.c.l.b16 %v343
    %v386 = vunpack.c.h.b16 %v343
    %v387 = vunpack.c.l.b16 %v344
    %v388 = vunpack.c.h.b16 %v344
    %v389 = vunpack.c.l.b16 %v345
    %v390 = vunpack.c.h.b16 %v345
    %v391 = vunpack.c.l.b16 %v346
    %v392 = vunpack.c.h.b16 %v346
    %v393 = vunpack.c.l.b16 %v347
    %v394 = vunpack.c.h.b16 %v347
    %v395 = vunpack.c.l.b16 %v348
    %v396 = vunpack.c.h.b16 %v348
    %v397 = vpack.c.b16 %v373, %v365
    %v398 = vpack.c.b16 %v374, %v366
    %v399 = vpack.c.b16 %v375, %v367
    %v400 = vpack.c.b16 %v376, %v368
    %v401 = vpack.c.b16 %v377, %v369
    %v402 = vpack.c.b16 %v378, %v370
    %v403 = vpack.c.b16 %v379, %v371
    %v404 = vpack.c.b16 %v380, %v372
    %v405 = vpack.c.b16 %v389, %v381
    %v406 = vpack.c.b16 %v390, %v382
    %v407 = vpack.c.b16 %v391, %v383
    %v408 = vpack.c.b16 %v392, %v384
    %v409 = vpack.c.b16 %v393, %v385
    %v410 = vpack.c.b16 %v394, %v386
    %v411 = vpack.c.b16 %v395, %v387
    %v412 = vpack.c.b16 %v396, %v388
    %v430 = vsel %vm149, %v45, 0
    %432 = vmatprep.subr.bf16.mxu0 %v398
    %433 = vmatpush1.bf16.msra.mxu0 %v397
    %434 = vmatprep.subr.bf16.mxu0 %v406
    %435 = vmatpush1.bf16.msra.mxu0 %v405
    %436 = vmatprep.subr.bf16.mxu0 0
    %437 = vmatpush1.bf16.msra.mxu0 0
    %438 = vmatprep.subr.bf16.mxu0 0
    %439 = vmatpush1.bf16.msra.mxu0 0
    %440 = vmatprep.subr.bf16.mxu0 0
    %441 = vmatpush1.bf16.msra.mxu0 0
    %442 = vmatprep.subr.bf16.mxu0 0
    %443 = vmatpush1.bf16.msra.mxu0 0
    %444 = vmatprep.subr.bf16.mxu0 0
    %445 = vmatpush1.bf16.msra.mxu0 0
    %446 = vmatprep.subr.bf16.mxu0 0
    %447 = vmatpush1.bf16.msra.mxu0 0
    %448 = vmatprep.subr.bf16.mxu0 0
    %449 = vmatpush1.bf16.msra.mxu0 0
    %450 = vmatprep.subr.bf16.mxu0 0
    %451 = vmatpush1.bf16.msra.mxu0 0
    %452 = vmatprep.subr.bf16.mxu0 0
    %453 = vmatpush1.bf16.msra.mxu0 0
    %454 = vmatprep.subr.bf16.mxu0 0
    %455 = vmatpush1.bf16.msra.mxu0 0
    %456 = vmatprep.subr.bf16.mxu0 0
    %457 = vmatpush1.bf16.msra.mxu0 0
    %458 = vmatprep.subr.bf16.mxu0 0
    %459 = vmatpush1.bf16.msra.mxu0 0
    %460 = vmatprep.subr.bf16.mxu0 0
    %461 = vmatpush1.bf16.msra.mxu0 0
    %462 = vmatprep.subr.bf16.mxu0 0
    %463 = vmatpush1.bf16.msra.mxu0 0
    %464 = vmatprep.mubr.bf16.mxu0 0
    %465 = vmatmul.mubr.bf16.gmra.mrb[0].mxu0 %v430
    %v466 = vpop.f32.mrb[0].mxu0
    %v467 = vadd.f32 0.0, %v466
    %v468 = vpop.f32.mrb[0].mxu0
    %v469 = vadd.f32 0.0, %v468
    %v470 = vpop.f32.mrb[0].mxu0
    %v471 = vadd.f32 0.0, %v470
    %v472 = vpop.f32.mrb[0].mxu0
    %v473 = vadd.f32 0.0, %v472
    %474 = vdwg.mxu0
    %475 = vmatprep.subr.bf16.mxu0 %v400
    %476 = vmatpush1.bf16.msra.mxu0 %v399
    %477 = vmatprep.subr.bf16.mxu0 %v408
    %478 = vmatpush1.bf16.msra.mxu0 %v407
    %479 = vmatprep.subr.bf16.mxu0 0
    %480 = vmatpush1.bf16.msra.mxu0 0
    %481 = vmatprep.subr.bf16.mxu0 0
    %482 = vmatpush1.bf16.msra.mxu0 0
    %483 = vmatprep.subr.bf16.mxu0 0
    %484 = vmatpush1.bf16.msra.mxu0 0
    %485 = vmatprep.subr.bf16.mxu0 0
    %486 = vmatpush1.bf16.msra.mxu0 0
    %487 = vmatprep.subr.bf16.mxu0 0
    %488 = vmatpush1.bf16.msra.mxu0 0
    %489 = vmatprep.subr.bf16.mxu0 0
    %490 = vmatpush1.bf16.msra.mxu0 0
    %491 = vmatprep.subr.bf16.mxu0 0
    %492 = vmatpush1.bf16.msra.mxu0 0
    %493 = vmatprep.subr.bf16.mxu0 0
    %494 = vmatpush1.bf16.msra.mxu0 0
    %495 = vmatprep.subr.bf16.mxu0 0
    %496 = vmatpush1.bf16.msra.mxu0 0
    %497 = vmatprep.subr.bf16.mxu0 0
    %498 = vmatpush1.bf16.msra.mxu0 0
    %499 = vmatprep.subr.bf16.mxu0 0
    %500 = vmatpush1.bf16.msra.mxu0 0
    %501 = vmatprep.subr.bf16.mxu0 0
    %502 = vmatpush1.bf16.msra.mxu0 0
    %503 = vmatprep.subr.bf16.mxu0 0
    %504 = vmatpush1.bf16.msra.mxu0 0
    %505 = vmatprep.subr.bf16.mxu0 0
    %506 = vmatpush1.bf16.msra.mxu0 0
    %507 = vmatprep.mubr.bf16.mxu0 0
    %508 = vmatmul.mubr.bf16.gmra.mrb[0].mxu0 %v430
    %v509 = vpop.f32.mrb[0].mxu0
    %v510 = vadd.f32 0.0, %v509
    %v511 = vpop.f32.mrb[0].mxu0
    %v512 = vadd.f32 0.0, %v511
    %v513 = vpop.f32.mrb[0].mxu0
    %v514 = vadd.f32 0.0, %v513
    %v515 = vpop.f32.mrb[0].mxu0
    %v516 = vadd.f32 0.0, %v515
    %517 = vdwg.mxu0
    %518 = vmatprep.subr.bf16.mxu0 %v402
    %519 = vmatpush1.bf16.msra.mxu0 %v401
    %520 = vmatprep.subr.bf16.mxu0 %v410
    %521 = vmatpush1.bf16.msra.mxu0 %v409
    %522 = vmatprep.subr.bf16.mxu0 0
    %523 = vmatpush1.bf16.msra.mxu0 0
    %524 = vmatprep.subr.bf16.mxu0 0
    %525 = vmatpush1.bf16.msra.mxu0 0
    %526 = vmatprep.subr.bf16.mxu0 0
    %527 = vmatpush1.bf16.msra.mxu0 0
    %528 = vmatprep.subr.bf16.mxu0 0
    %529 = vmatpush1.bf16.msra.mxu0 0
    %530 = vmatprep.subr.bf16.mxu0 0
    %531 = vmatpush1.bf16.msra.mxu0 0
    %532 = vmatprep.subr.bf16.mxu0 0
    %533 = vmatpush1.bf16.msra.mxu0 0
    %534 = vmatprep.subr.bf16.mxu0 0
    %535 = vmatpush1.bf16.msra.mxu0 0
    %536 = vmatprep.subr.bf16.mxu0 0
    %537 = vmatpush1.bf16.msra.mxu0 0
    %538 = vmatprep.subr.bf16.mxu0 0
    %539 = vmatpush1.bf16.msra.mxu0 0
    %540 = vmatprep.subr.bf16.mxu0 0
    %541 = vmatpush1.bf16.msra.mxu0 0
    %542 = vmatprep.subr.bf16.mxu0 0
    %543 = vmatpush1.bf16.msra.mxu0 0
    %544 = vmatprep.subr.bf16.mxu0 0
    %545 = vmatpush1.bf16.msra.mxu0 0
    %546 = vmatprep.subr.bf16.mxu0 0
    %547 = vmatpush1.bf16.msra.mxu0 0
    %548 = vmatprep.subr.bf16.mxu0 0
    %549 = vmatpush1.bf16.msra.mxu0 0
    %550 = vmatprep.mubr.bf16.mxu0 0
    %551 = vmatmul.mubr.bf16.gmra.mrb[0].mxu0 %v430
    %v552 = vpop.f32.mrb[0].mxu0
    %v553 = vadd.f32 0.0, %v552
    %v554 = vpop.f32.mrb[0].mxu0
    %v555 = vadd.f32 0.0, %v554
    %v556 = vpop.f32.mrb[0].mxu0
    %v557 = vadd.f32 0.0, %v556
    %v558 = vpop.f32.mrb[0].mxu0
    %v559 = vadd.f32 0.0, %v558
    %560 = vdwg.mxu0
    %561 = vmatprep.subr.bf16.mxu0 %v404
    %562 = vmatpush1.bf16.msra.mxu0 %v403
    %563 = vmatprep.subr.bf16.mxu0 %v412
    %564 = vmatpush1.bf16.msra.mxu0 %v411
    %565 = vmatprep.subr.bf16.mxu0 0
    %566 = vmatpush1.bf16.msra.mxu0 0
    %567 = vmatprep.subr.bf16.mxu0 0
    %568 = vmatpush1.bf16.msra.mxu0 0
    %569 = vmatprep.subr.bf16.mxu0 0
    %570 = vmatpush1.bf16.msra.mxu0 0
    %571 = vmatprep.subr.bf16.mxu0 0
    %572 = vmatpush1.bf16.msra.mxu0 0
    %573 = vmatprep.subr.bf16.mxu0 0
    %574 = vmatpush1.bf16.msra.mxu0 0
    %575 = vmatprep.subr.bf16.mxu0 0
    %576 = vmatpush1.bf16.msra.mxu0 0
    %577 = vmatprep.subr.bf16.mxu0 0
    %578 = vmatpush1.bf16.msra.mxu0 0
    %579 = vmatprep.subr.bf16.mxu0 0
    %580 = vmatpush1.bf16.msra.mxu0 0
    %581 = vmatprep.subr.bf16.mxu0 0
    %582 = vmatpush1.bf16.msra.mxu0 0
    %583 = vmatprep.subr.bf16.mxu0 0
    %584 = vmatpush1.bf16.msra.mxu0 0
    %585 = vmatprep.subr.bf16.mxu0 0
    %586 = vmatpush1.bf16.msra.mxu0 0
    %587 = vmatprep.subr.bf16.mxu0 0
    %588 = vmatpush1.bf16.msra.mxu0 0
    %589 = vmatprep.subr.bf16.mxu0 0
    %590 = vmatpush1.bf16.msra.mxu0 0
    %591 = vmatprep.subr.bf16.mxu0 0
    %592 = vmatpush1.bf16.msra.mxu0 0
    %593 = vmatprep.mubr.bf16.mxu0 0
    %594 = vmatmul.mubr.bf16.gmra.mrb[0].mxu0 %v430
    %v595 = vpop.f32.mrb[0].mxu0
    %v596 = vadd.f32 0.0, %v595
    %v597 = vpop.f32.mrb[0].mxu0
    %v598 = vadd.f32 0.0, %v597
    %v599 = vpop.f32.mrb[0].mxu0
    %v600 = vadd.f32 0.0, %v599
    %v601 = vpop.f32.mrb[0].mxu0
    %v602 = vadd.f32 0.0, %v601
    %603 = vdwg.mxu0
    %v604 = vpack.c.bf16 %v471, %v467
    %v605 = vpack.c.bf16 %v473, %v469
    %v606 = vpack.c.bf16 %v514, %v510
    %v607 = vpack.c.bf16 %v516, %v512
    %v608 = vpack.c.bf16 %v557, %v553
    %v609 = vpack.c.bf16 %v559, %v555
    %v610 = vpack.c.bf16 %v600, %v596
    %v611 = vpack.c.bf16 %v602, %v598
    %v612 = vmul.bf16 %v325, %v604
    %v613 = vmul.bf16 %v326, %v605
    %v614 = vmul.bf16 %v327, %v606
    %v615 = vmul.bf16 %v328, %v607
    %v616 = vmul.bf16 %v329, %v608
    %v617 = vmul.bf16 %v330, %v609
    %v618 = vmul.bf16 %v331, %v610
    %v619 = vmul.bf16 %v332, %v611
    %v620 = vld [vmem:[%s5] sm:$0xf]
    %v621 = vld [vmem:[%s5 + $0x4] sm:$0xf]
    %v622 = vld [vmem:[%s5 + $0x8] sm:$0xf]
    %v623 = vld [vmem:[%s5 + $0xc] sm:$0xf]
    %v624 = vld [vmem:[%s5 + $0x10] sm:$0xf]
    %v625 = vld [vmem:[%s5 + $0x14] sm:$0xf]
    %v626 = vld [vmem:[%s5 + $0x18] sm:$0xf]
    %v627 = vld [vmem:[%s5 + $0x1c] sm:$0xf]
    %v628 = vld [vmem:[%s5 + $0x20] sm:$0xf]
    %v629 = vld [vmem:[%s5 + $0x24] sm:$0xf]
    %v630 = vld [vmem:[%s5 + $0x28] sm:$0xf]
    %v631 = vld [vmem:[%s5 + $0x2c] sm:$0xf]
    %v632 = vld [vmem:[%s5 + $0x30] sm:$0xf]
    %v633 = vld [vmem:[%s5 + $0x34] sm:$0xf]
    %v634 = vld [vmem:[%s5 + $0x38] sm:$0xf]
    %v635 = vld [vmem:[%s5 + $0x3c] sm:$0xf]
    %v636 = vld [vmem:[%s5 + $0x40] sm:$0xf]
    %v637 = vld [vmem:[%s5 + $0x44] sm:$0xf]
    %v638 = vld [vmem:[%s5 + $0x48] sm:$0xf]
    %v639 = vld [vmem:[%s5 + $0x4c] sm:$0xf]
    %v640 = vld [vmem:[%s5 + $0x50] sm:$0xf]
    %v641 = vld [vmem:[%s5 + $0x54] sm:$0xf]
    %v642 = vld [vmem:[%s5 + $0x58] sm:$0xf]
    %v643 = vld [vmem:[%s5 + $0x5c] sm:$0xf]
    %v644 = vld [vmem:[%s5 + $0x60] sm:$0xf]
    %v645 = vld [vmem:[%s5 + $0x64] sm:$0xf]
    %v646 = vld [vmem:[%s5 + $0x68] sm:$0xf]
    %v647 = vld [vmem:[%s5 + $0x6c] sm:$0xf]
    %v648 = vld [vmem:[%s5 + $0x70] sm:$0xf]
    %v649 = vld [vmem:[%s5 + $0x74] sm:$0xf]
    %v650 = vld [vmem:[%s5 + $0x78] sm:$0xf]
    %v651 = vld [vmem:[%s5 + $0x7c] sm:$0xf]
    %v652 = vld [vmem:[%s5 + $0x80] sm:$0xf]
    %v653 = vld [vmem:[%s5 + $0x84] sm:$0xf]
    %v654 = vld [vmem:[%s5 + $0x88] sm:$0xf]
    %v655 = vld [vmem:[%s5 + $0x8c] sm:$0xf]
    %v656 = vld [vmem:[%s5 + $0x90] sm:$0xf]
    %v657 = vld [vmem:[%s5 + $0x94] sm:$0xf]
    %v658 = vld [vmem:[%s5 + $0x98] sm:$0xf]
    %v659 = vld [vmem:[%s5 + $0x9c] sm:$0xf]
    %v660 = vld [vmem:[%s5 + $0xa0] sm:$0xf]
    %v661 = vld [vmem:[%s5 + $0xa4] sm:$0xf]
    %v662 = vld [vmem:[%s5 + $0xa8] sm:$0xf]
    %v663 = vld [vmem:[%s5 + $0xac] sm:$0xf]
    %v664 = vld [vmem:[%s5 + $0xb0] sm:$0xf]
    %v665 = vld [vmem:[%s5 + $0xb4] sm:$0xf]
    %v666 = vld [vmem:[%s5 + $0xb8] sm:$0xf]
    %v667 = vld [vmem:[%s5 + $0xbc] sm:$0xf]
    %v668 = vld [vmem:[%s5 + $0xc0] sm:$0xf]
    %v669 = vld [vmem:[%s5 + $0xc4] sm:$0xf]
    %v670 = vld [vmem:[%s5 + $0xc8] sm:$0xf]
    %v671 = vld [vmem:[%s5 + $0xcc] sm:$0xf]
    %v672 = vld [vmem:[%s5 + $0xd0] sm:$0xf]
    %v673 = vld [vmem:[%s5 + $0xd4] sm:$0xf]
    %v674 = vld [vmem:[%s5 + $0xd8] sm:$0xf]
    %v675 = vld [vmem:[%s5 + $0xdc] sm:$0xf]
    %v676 = vld [vmem:[%s5 + $0xe0] sm:$0xf]
    %v677 = vld [vmem:[%s5 + $0xe4] sm:$0xf]
    %v678 = vld [vmem:[%s5 + $0xe8] sm:$0xf]
    %v679 = vld [vmem:[%s5 + $0xec] sm:$0xf]
    %v680 = vld [vmem:[%s5 + $0xf0] sm:$0xf]
    %v681 = vld [vmem:[%s5 + $0xf4] sm:$0xf]
    %v682 = vld [vmem:[%s5 + $0xf8] sm:$0xf]
    %v683 = vld [vmem:[%s5 + $0xfc] sm:$0xf]
    %v684 = vld [vmem:[%s5 + $0x100] sm:$0xf]
    %v685 = vld [vmem:[%s5 + $0x104] sm:$0xf]
    %v686 = vld [vmem:[%s5 + $0x108] sm:$0xf]
    %v687 = vld [vmem:[%s5 + $0x10c] sm:$0xf]
    %v688 = vld [vmem:[%s5 + $0x110] sm:$0xf]
    %v689 = vld [vmem:[%s5 + $0x114] sm:$0xf]
    %v690 = vld [vmem:[%s5 + $0x118] sm:$0xf]
    %v691 = vld [vmem:[%s5 + $0x11c] sm:$0xf]
    %v692 = vld [vmem:[%s5 + $0x120] sm:$0xf]
    %v693 = vld [vmem:[%s5 + $0x124] sm:$0xf]
    %v694 = vld [vmem:[%s5 + $0x128] sm:$0xf]
    %v695 = vld [vmem:[%s5 + $0x12c] sm:$0xf]
    %v696 = vld [vmem:[%s5 + $0x130] sm:$0xf]
    %v697 = vld [vmem:[%s5 + $0x134] sm:$0xf]
    %v698 = vld [vmem:[%s5 + $0x138] sm:$0xf]
    %v699 = vld [vmem:[%s5 + $0x13c] sm:$0xf]
    %v700 = vld [vmem:[%s5 + $0x140] sm:$0xf]
    %v701 = vld [vmem:[%s5 + $0x144] sm:$0xf]
    %v702 = vld [vmem:[%s5 + $0x148] sm:$0xf]
    %v703 = vld [vmem:[%s5 + $0x14c] sm:$0xf]
    %v704 = vld [vmem:[%s5 + $0x150] sm:$0xf]
    %v705 = vld [vmem:[%s5 + $0x154] sm:$0xf]
    %v706 = vld [vmem:[%s5 + $0x158] sm:$0xf]
    %v707 = vld [vmem:[%s5 + $0x15c] sm:$0xf]
    %v708 = vld [vmem:[%s5 + $0x160] sm:$0xf]
    %v709 = vld [vmem:[%s5 + $0x164] sm:$0xf]
    %v710 = vld [vmem:[%s5 + $0x168] sm:$0xf]
    %v711 = vld [vmem:[%s5 + $0x16c] sm:$0xf]
    %v712 = vld [vmem:[%s5 + $0x170] sm:$0xf]
    %v713 = vld [vmem:[%s5 + $0x174] sm:$0xf]
    %v714 = vld [vmem:[%s5 + $0x178] sm:$0xf]
    %v715 = vld [vmem:[%s5 + $0x17c] sm:$0xf]
    %v716 = vld [vmem:[%s5 + $0x180] sm:$0xf]
    %v717 = vld [vmem:[%s5 + $0x184] sm:$0xf]
    %v718 = vld [vmem:[%s5 + $0x188] sm:$0xf]
    %v719 = vld [vmem:[%s5 + $0x18c] sm:$0xf]
    %v720 = vld [vmem:[%s5 + $0x190] sm:$0xf]
    %v721 = vld [vmem:[%s5 + $0x194] sm:$0xf]
    %v722 = vld [vmem:[%s5 + $0x198] sm:$0xf]
    %v723 = vld [vmem:[%s5 + $0x19c] sm:$0xf]
    %v724 = vld [vmem:[%s5 + $0x1a0] sm:$0xf]
    %v725 = vld [vmem:[%s5 + $0x1a4] sm:$0xf]
    %v726 = vld [vmem:[%s5 + $0x1a8] sm:$0xf]
    %v727 = vld [vmem:[%s5 + $0x1ac] sm:$0xf]
    %v728 = vld [vmem:[%s5 + $0x1b0] sm:$0xf]
    %v729 = vld [vmem:[%s5 + $0x1b4] sm:$0xf]
    %v730 = vld [vmem:[%s5 + $0x1b8] sm:$0xf]
    %v731 = vld [vmem:[%s5 + $0x1bc] sm:$0xf]
    %v732 = vld [vmem:[%s5 + $0x1c0] sm:$0xf]
    %v733 = vld [vmem:[%s5 + $0x1c4] sm:$0xf]
    %v734 = vld [vmem:[%s5 + $0x1c8] sm:$0xf]
    %v735 = vld [vmem:[%s5 + $0x1cc] sm:$0xf]
    %v736 = vld [vmem:[%s5 + $0x1d0] sm:$0xf]
    %v737 = vld [vmem:[%s5 + $0x1d4] sm:$0xf]
    %v738 = vld [vmem:[%s5 + $0x1d8] sm:$0xf]
    %v739 = vld [vmem:[%s5 + $0x1dc] sm:$0xf]
    %v740 = vld [vmem:[%s5 + $0x1e0] sm:$0xf]
    %v741 = vld [vmem:[%s5 + $0x1e4] sm:$0xf]
    %v742 = vld [vmem:[%s5 + $0x1e8] sm:$0xf]
    %v743 = vld [vmem:[%s5 + $0x1ec] sm:$0xf]
    %v744 = vld [vmem:[%s5 + $0x1f0] sm:$0xf]
    %v745 = vld [vmem:[%s5 + $0x1f4] sm:$0xf]
    %v746 = vld [vmem:[%s5 + $0x1f8] sm:$0xf]
    %v747 = vld [vmem:[%s5 + $0x1fc] sm:$0xf]
    %v748 = vld [vmem:[%s6] sm:$0x1]
    %v750 = vlaneseq
    %v751 = vshrl.u32 %v750, 7
    %v752 = vsub.s32 0, %v751
    %v753 = vrot.slane %v748, %v752
    %v883 = vunpack.c.l.b16 %v620
    %v884 = vunpack.c.l.b16 %v621
    %v885 = vunpack.c.l.b16 %v622
    %v886 = vunpack.c.l.b16 %v623
    %v887 = vunpack.c.l.b16 %v624
    %v888 = vunpack.c.l.b16 %v625
    %v889 = vunpack.c.l.b16 %v626
    %v890 = vunpack.c.l.b16 %v627
    %v891 = vunpack.c.l.b16 %v628
    %v892 = vunpack.c.l.b16 %v629
    %v893 = vunpack.c.l.b16 %v630
    %v894 = vunpack.c.l.b16 %v631
    %v895 = vunpack.c.l.b16 %v632
    %v896 = vunpack.c.l.b16 %v633
    %v897 = vunpack.c.l.b16 %v634
    %v898 = vunpack.c.l.b16 %v635
    %v899 = vunpack.c.l.b16 %v636
    %v900 = vunpack.c.l.b16 %v637
    %v901 = vunpack.c.l.b16 %v638
    %v902 = vunpack.c.l.b16 %v639
    %v903 = vunpack.c.l.b16 %v640
    %v904 = vunpack.c.l.b16 %v641
    %v905 = vunpack.c.l.b16 %v642
    %v906 = vunpack.c.l.b16 %v643
    %v907 = vunpack.c.l.b16 %v644
    %v908 = vunpack.c.l.b16 %v645
    %v909 = vunpack.c.l.b16 %v646
    %v910 = vunpack.c.l.b16 %v647
    %v911 = vunpack.c.l.b16 %v648
    %v912 = vunpack.c.l.b16 %v649
    %v913 = vunpack.c.l.b16 %v650
    %v914 = vunpack.c.l.b16 %v651
    %v915 = vunpack.c.l.b16 %v652
    %v916 = vunpack.c.l.b16 %v653
    %v917 = vunpack.c.l.b16 %v654
    %v918 = vunpack.c.l.b16 %v655
    %v919 = vunpack.c.l.b16 %v656
    %v920 = vunpack.c.l.b16 %v657
    %v921 = vunpack.c.l.b16 %v658
    %v922 = vunpack.c.l.b16 %v659
    %v923 = vunpack.c.l.b16 %v660
    %v924 = vunpack.c.l.b16 %v661
    %v925 = vunpack.c.l.b16 %v662
    %v926 = vunpack.c.l.b16 %v663
    %v927 = vunpack.c.l.b16 %v664
    %v928 = vunpack.c.l.b16 %v665
    %v929 = vunpack.c.l.b16 %v666
    %v930 = vunpack.c.l.b16 %v667
    %v931 = vunpack.c.l.b16 %v668
    %v932 = vunpack.c.l.b16 %v669
    %v933 = vunpack.c.l.b16 %v670
    %v934 = vunpack.c.l.b16 %v671
    %v935 = vunpack.c.l.b16 %v672
    %v936 = vunpack.c.l.b16 %v673
    %v937 = vunpack.c.l.b16 %v674
    %v938 = vunpack.c.l.b16 %v675
    %v939 = vunpack.c.l.b16 %v676
    %v940 = vunpack.c.l.b16 %v677
    %v941 = vunpack.c.l.b16 %v678
    %v942 = vunpack.c.l.b16 %v679
    %v943 = vunpack.c.l.b16 %v680
    %v944 = vunpack.c.l.b16 %v681
    %v945 = vunpack.c.l.b16 %v682
    %v946 = vunpack.c.l.b16 %v683
    %v947 = vunpack.c.l.b16 %v684
    %v948 = vunpack.c.l.b16 %v685
    %v949 = vunpack.c.l.b16 %v686
    %v950 = vunpack.c.l.b16 %v687
    %v951 = vunpack.c.l.b16 %v688
    %v952 = vunpack.c.l.b16 %v689
    %v953 = vunpack.c.l.b16 %v690
    %v954 = vunpack.c.l.b16 %v691
    %v955 = vunpack.c.l.b16 %v692
    %v956 = vunpack.c.l.b16 %v693
    %v957 = vunpack.c.l.b16 %v694
    %v958 = vunpack.c.l.b16 %v695
    %v959 = vunpack.c.l.b16 %v696
    %v960 = vunpack.c.l.b16 %v697
    %v961 = vunpack.c.l.b16 %v698
    %v962 = vunpack.c.l.b16 %v699
    %v963 = vunpack.c.l.b16 %v700
    %v964 = vunpack.c.l.b16 %v701
    %v965 = vunpack.c.l.b16 %v702
    %v966 = vunpack.c.l.b16 %v703
    %v967 = vunpack.c.l.b16 %v704
    %v968 = vunpack.c.l.b16 %v705
    %v969 = vunpack.c.l.b16 %v706
    %v970 = vunpack.c.l.b16 %v707
    %v971 = vunpack.c.l.b16 %v708
    %v972 = vunpack.c.l.b16 %v709
    %v973 = vunpack.c.l.b16 %v710
    %v974 = vunpack.c.l.b16 %v711
    %v975 = vunpack.c.l.b16 %v712
    %v976 = vunpack.c.l.b16 %v713
    %v977 = vunpack.c.l.b16 %v714
    %v978 = vunpack.c.l.b16 %v715
    %v979 = vunpack.c.l.b16 %v716
    %v980 = vunpack.c.l.b16 %v717
    %v981 = vunpack.c.l.b16 %v718
    %v982 = vunpack.c.l.b16 %v719
    %v983 = vunpack.c.l.b16 %v720
    %v984 = vunpack.c.l.b16 %v721
    %v985 = vunpack.c.l.b16 %v722
    %v986 = vunpack.c.l.b16 %v723
    %v987 = vunpack.c.l.b16 %v724
    %v988 = vunpack.c.l.b16 %v725
    %v989 = vunpack.c.l.b16 %v726
    %v990 = vunpack.c.l.b16 %v727
    %v991 = vunpack.c.l.b16 %v728
    %v992 = vunpack.c.l.b16 %v729
    %v993 = vunpack.c.l.b16 %v730
    %v994 = vunpack.c.l.b16 %v731
    %v995 = vunpack.c.l.b16 %v732
    %v996 = vunpack.c.l.b16 %v733
    %v997 = vunpack.c.l.b16 %v734
    %v998 = vunpack.c.l.b16 %v735
    %v999 = vunpack.c.l.b16 %v736
    %v1000 = vunpack.c.l.b16 %v737
    %v1001 = vunpack.c.l.b16 %v738
    %v1002 = vunpack.c.l.b16 %v739
    %v1003 = vunpack.c.l.b16 %v740
    %v1004 = vunpack.c.l.b16 %v741
    %v1005 = vunpack.c.l.b16 %v742
    %v1006 = vunpack.c.l.b16 %v743
    %v1007 = vunpack.c.l.b16 %v744
    %v1008 = vunpack.c.l.b16 %v745
    %v1009 = vunpack.c.l.b16 %v746
    %v1010 = vunpack.c.l.b16 %v747
    %v1011 = vpack.c.b16 %v884, %v883
    %v1012 = vpack.c.b16 %v886, %v885
    %v1013 = vpack.c.b16 %v888, %v887
    %v1014 = vpack.c.b16 %v890, %v889
    %v1015 = vpack.c.b16 %v892, %v891
    %v1016 = vpack.c.b16 %v894, %v893
    %v1017 = vpack.c.b16 %v896, %v895
    %v1018 = vpack.c.b16 %v898, %v897
    %v1019 = vpack.c.b16 %v900, %v899
    %v1020 = vpack.c.b16 %v902, %v901
    %v1021 = vpack.c.b16 %v904, %v903
    %v1022 = vpack.c.b16 %v906, %v905
    %v1023 = vpack.c.b16 %v908, %v907
    %v1024 = vpack.c.b16 %v910, %v909
    %v1025 = vpack.c.b16 %v912, %v911
    %v1026 = vpack.c.b16 %v914, %v913
    %v1027 = vpack.c.b16 %v916, %v915
    %v1028 = vpack.c.b16 %v918, %v917
    %v1029 = vpack.c.b16 %v920, %v919
    %v1030 = vpack.c.b16 %v922, %v921
    %v1031 = vpack.c.b16 %v924, %v923
    %v1032 = vpack.c.b16 %v926, %v925
    %v1033 = vpack.c.b16 %v928, %v927
    %v1034 = vpack.c.b16 %v930, %v929
    %v1035 = vpack.c.b16 %v932, %v931
    %v1036 = vpack.c.b16 %v934, %v933
    %v1037 = vpack.c.b16 %v936, %v935
    %v1038 = vpack.c.b16 %v938, %v937
    %v1039 = vpack.c.b16 %v940, %v939
    %v1040 = vpack.c.b16 %v942, %v941
    %v1041 = vpack.c.b16 %v944, %v943
    %v1042 = vpack.c.b16 %v946, %v945
    %v1043 = vpack.c.b16 %v948, %v947
    %v1044 = vpack.c.b16 %v950, %v949
    %v1045 = vpack.c.b16 %v952, %v951
    %v1046 = vpack.c.b16 %v954, %v953
    %v1047 = vpack.c.b16 %v956, %v955
    %v1048 = vpack.c.b16 %v958, %v957
    %v1049 = vpack.c.b16 %v960, %v959
    %v1050 = vpack.c.b16 %v962, %v961
    %v1051 = vpack.c.b16 %v964, %v963
    %v1052 = vpack.c.b16 %v966, %v965
    %v1053 = vpack.c.b16 %v968, %v967
    %v1054 = vpack.c.b16 %v970, %v969
    %v1055 = vpack.c.b16 %v972, %v971
    %v1056 = vpack.c.b16 %v974, %v973
    %v1057 = vpack.c.b16 %v976, %v975
    %v1058 = vpack.c.b16 %v978, %v977
    %v1059 = vpack.c.b16 %v980, %v979
    %v1060 = vpack.c.b16 %v982, %v981
    %v1061 = vpack.c.b16 %v984, %v983
    %v1062 = vpack.c.b16 %v986, %v985
    %v1063 = vpack.c.b16 %v988, %v987
    %v1064 = vpack.c.b16 %v990, %v989
    %v1065 = vpack.c.b16 %v992, %v991
    %v1066 = vpack.c.b16 %v994, %v993
    %v1067 = vpack.c.b16 %v996, %v995
    %v1068 = vpack.c.b16 %v998, %v997
    %v1069 = vpack.c.b16 %v1000, %v999
    %v1070 = vpack.c.b16 %v1002, %v1001
    %v1071 = vpack.c.b16 %v1004, %v1003
    %v1072 = vpack.c.b16 %v1006, %v1005
    %v1073 = vpack.c.b16 %v1008, %v1007
    %v1074 = vpack.c.b16 %v1010, %v1009
    %1139 = vmatprep.subr.bf16.mxu0 0
    %1140 = vmatpush1.bf16.msra.mxu0 %v1011
    %1141 = vmatprep.subr.bf16.mxu0 0
    %1142 = vmatpush1.bf16.msra.mxu0 %v1012
    %1143 = vmatprep.subr.bf16.mxu0 0
    %1144 = vmatpush1.bf16.msra.mxu0 %v1013
    %1145 = vmatprep.subr.bf16.mxu0 0
    %1146 = vmatpush1.bf16.msra.mxu0 %v1014
    %1147 = vmatprep.subr.bf16.mxu0 0
    %1148 = vmatpush1.bf16.msra.mxu0 %v1015
    %1149 = vmatprep.subr.bf16.mxu0 0
    %1150 = vmatpush1.bf16.msra.mxu0 %v1016
    %1151 = vmatprep.subr.bf16.mxu0 0
    %1152 = vmatpush1.bf16.msra.mxu0 %v1017
    %1153 = vmatprep.subr.bf16.mxu0 0
    %1154 = vmatpush1.bf16.msra.mxu0 %v1018
    %1155 = vmatprep.subr.bf16.mxu0 0
    %1156 = vmatpush1.bf16.msra.mxu0 %v1019
    %1157 = vmatprep.subr.bf16.mxu0 0
    %1158 = vmatpush1.bf16.msra.mxu0 %v1020
    %1159 = vmatprep.subr.bf16.mxu0 0
    %1160 = vmatpush1.bf16.msra.mxu0 %v1021
    %1161 = vmatprep.subr.bf16.mxu0 0
    %1162 = vmatpush1.bf16.msra.mxu0 %v1022
    %1163 = vmatprep.subr.bf16.mxu0 0
    %1164 = vmatpush1.bf16.msra.mxu0 %v1023
    %1165 = vmatprep.subr.bf16.mxu0 0
    %1166 = vmatpush1.bf16.msra.mxu0 %v1024
    %1167 = vmatprep.subr.bf16.mxu0 0
    %1168 = vmatpush1.bf16.msra.mxu0 %v1025
    %1169 = vmatprep.subr.bf16.mxu0 0
    %1170 = vmatpush1.bf16.msra.mxu0 %v1026
    %1171 = vmatprep.mubr.bf16.mxu0 %v613
    %1172 = vmatmul.mubr.bf16.gmra.mrb[0].mxu0 %v612
    %v1173 = vpop.f32.mrb[0].mxu0
    %v1174 = vadd.f32 %v753, %v1173
    %v1175 = vpop.f32.mrb[0].mxu0
    %v1176 = vpop.f32.mrb[0].mxu0
    %v1177 = vadd.f32 %v753, %v1176
    %v1178 = vpop.f32.mrb[0].mxu0
    %1179 = vdwg.mxu0
    %1180 = vmatprep.subr.bf16.mxu0 0
    %1181 = vmatpush1.bf16.msra.mxu0 %v1027
    %1182 = vmatprep.subr.bf16.mxu0 0
    %1183 = vmatpush1.bf16.msra.mxu0 %v1028
    %1184 = vmatprep.subr.bf16.mxu0 0
    %1185 = vmatpush1.bf16.msra.mxu0 %v1029
    %1186 = vmatprep.subr.bf16.mxu0 0
    %1187 = vmatpush1.bf16.msra.mxu0 %v1030
    %1188 = vmatprep.subr.bf16.mxu0 0
    %1189 = vmatpush1.bf16.msra.mxu0 %v1031
    %1190 = vmatprep.subr.bf16.mxu0 0
    %1191 = vmatpush1.bf16.msra.mxu0 %v1032
    %1192 = vmatprep.subr.bf16.mxu0 0
    %1193 = vmatpush1.bf16.msra.mxu0 %v1033
    %1194 = vmatprep.subr.bf16.mxu0 0
    %1195 = vmatpush1.bf16.msra.mxu0 %v1034
    %1196 = vmatprep.subr.bf16.mxu0 0
    %1197 = vmatpush1.bf16.msra.mxu0 %v1035
    %1198 = vmatprep.subr.bf16.mxu0 0
    %1199 = vmatpush1.bf16.msra.mxu0 %v1036
    %1200 = vmatprep.subr.bf16.mxu0 0
    %1201 = vmatpush1.bf16.msra.mxu0 %v1037
    %1202 = vmatprep.subr.bf16.mxu0 0
    %1203 = vmatpush1.bf16.msra.mxu0 %v1038
    %1204 = vmatprep.subr.bf16.mxu0 0
    %1205 = vmatpush1.bf16.msra.mxu0 %v1039
    %1206 = vmatprep.subr.bf16.mxu0 0
    %1207 = vmatpush1.bf16.msra.mxu0 %v1040
    %1208 = vmatprep.subr.bf16.mxu0 0
    %1209 = vmatpush1.bf16.msra.mxu0 %v1041
    %1210 = vmatprep.subr.bf16.mxu0 0
    %1211 = vmatpush1.bf16.msra.mxu0 %v1042
    %1212 = vmatprep.mubr.bf16.mxu0 %v615
    %1213 = vmatmul.mubr.bf16.gmra.mrb[0].mxu0 %v614
    %v1214 = vpop.f32.mrb[0].mxu0
    %v1215 = vadd.f32 %v1174, %v1214
    %v1216 = vpop.f32.mrb[0].mxu0
    %v1217 = vpop.f32.mrb[0].mxu0
    %v1218 = vadd.f32 %v1177, %v1217
    %v1219 = vpop.f32.mrb[0].mxu0
    %1220 = vdwg.mxu0
    %1221 = vmatprep.subr.bf16.mxu0 0
    %1222 = vmatpush1.bf16.msra.mxu0 %v1043
    %1223 = vmatprep.subr.bf16.mxu0 0
    %1224 = vmatpush1.bf16.msra.mxu0 %v1044
    %1225 = vmatprep.subr.bf16.mxu0 0
    %1226 = vmatpush1.bf16.msra.mxu0 %v1045
    %1227 = vmatprep.subr.bf16.mxu0 0
    %1228 = vmatpush1.bf16.msra.mxu0 %v1046
    %1229 = vmatprep.subr.bf16.mxu0 0
    %1230 = vmatpush1.bf16.msra.mxu0 %v1047
    %1231 = vmatprep.subr.bf16.mxu0 0
    %1232 = vmatpush1.bf16.msra.mxu0 %v1048
    %1233 = vmatprep.subr.bf16.mxu0 0
    %1234 = vmatpush1.bf16.msra.mxu0 %v1049
    %1235 = vmatprep.subr.bf16.mxu0 0
    %1236 = vmatpush1.bf16.msra.mxu0 %v1050
    %1237 = vmatprep.subr.bf16.mxu0 0
    %1238 = vmatpush1.bf16.msra.mxu0 %v1051
    %1239 = vmatprep.subr.bf16.mxu0 0
    %1240 = vmatpush1.bf16.msra.mxu0 %v1052
    %1241 = vmatprep.subr.bf16.mxu0 0
    %1242 = vmatpush1.bf16.msra.mxu0 %v1053
    %1243 = vmatprep.subr.bf16.mxu0 0
    %1244 = vmatpush1.bf16.msra.mxu0 %v1054
    %1245 = vmatprep.subr.bf16.mxu0 0
    %1246 = vmatpush1.bf16.msra.mxu0 %v1055
    %1247 = vmatprep.subr.bf16.mxu0 0
    %1248 = vmatpush1.bf16.msra.mxu0 %v1056
    %1249 = vmatprep.subr.bf16.mxu0 0
    %1250 = vmatpush1.bf16.msra.mxu0 %v1057
    %1251 = vmatprep.subr.bf16.mxu0 0
    %1252 = vmatpush1.bf16.msra.mxu0 %v1058
    %1253 = vmatprep.mubr.bf16.mxu0 %v617
    %1254 = vmatmul.mubr.bf16.gmra.mrb[0].mxu0 %v616
    %v1255 = vpop.f32.mrb[0].mxu0
    %v1256 = vadd.f32 %v1215, %v1255
    %v1257 = vpop.f32.mrb[0].mxu0
    %v1258 = vpop.f32.mrb[0].mxu0
    %v1259 = vadd.f32 %v1218, %v1258
    %v1260 = vpop.f32.mrb[0].mxu0
    %1261 = vdwg.mxu0
    %1262 = vmatprep.subr.bf16.mxu0 0
    %1263 = vmatpush1.bf16.msra.mxu0 %v1059
    %1264 = vmatprep.subr.bf16.mxu0 0
    %1265 = vmatpush1.bf16.msra.mxu0 %v1060
    %1266 = vmatprep.subr.bf16.mxu0 0
    %1267 = vmatpush1.bf16.msra.mxu0 %v1061
    %1268 = vmatprep.subr.bf16.mxu0 0
    %1269 = vmatpush1.bf16.msra.mxu0 %v1062
    %1270 = vmatprep.subr.bf16.mxu0 0
    %1271 = vmatpush1.bf16.msra.mxu0 %v1063
    %1272 = vmatprep.subr.bf16.mxu0 0
    %1273 = vmatpush1.bf16.msra.mxu0 %v1064
    %1274 = vmatprep.subr.bf16.mxu0 0
    %1275 = vmatpush1.bf16.msra.mxu0 %v1065
    %1276 = vmatprep.subr.bf16.mxu0 0
    %1277 = vmatpush1.bf16.msra.mxu0 %v1066
    %1278 = vmatprep.subr.bf16.mxu0 0
    %1279 = vmatpush1.bf16.msra.mxu0 %v1067
    %1280 = vmatprep.subr.bf16.mxu0 0
    %1281 = vmatpush1.bf16.msra.mxu0 %v1068
    %1282 = vmatprep.subr.bf16.mxu0 0
    %1283 = vmatpush1.bf16.msra.mxu0 %v1069
    %1284 = vmatprep.subr.bf16.mxu0 0
    %1285 = vmatpush1.bf16.msra.mxu0 %v1070
    %1286 = vmatprep.subr.bf16.mxu0 0
    %1287 = vmatpush1.bf16.msra.mxu0 %v1071
    %1288 = vmatprep.subr.bf16.mxu0 0
    %1289 = vmatpush1.bf16.msra.mxu0 %v1072
    %1290 = vmatprep.subr.bf16.mxu0 0
    %1291 = vmatpush1.bf16.msra.mxu0 %v1073
    %1292 = vmatprep.subr.bf16.mxu0 0
    %1293 = vmatpush1.bf16.msra.mxu0 %v1074
    %1294 = vmatprep.mubr.bf16.mxu0 %v619
    %1295 = vmatmul.mubr.bf16.gmra.mrb[0].mxu0 %v618
    %v1296 = vpop.f32.mrb[0].mxu0
    %v1297 = vadd.f32 %v1256, %v1296
    %v1298 = vpop.f32.mrb[0].mxu0
    %v1299 = vpop.f32.mrb[0].mxu0
    %v1300 = vadd.f32 %v1259, %v1299
    %v1301 = vpop.f32.mrb[0].mxu0
    %1302 = vdwg.mxu0
    %v1303 = vxor.u32 %v1297, 2147483648
    %v1304 = vxor.u32 %v1300, 2147483648
    %v1305 = vmul.f32 %v1303, 1.442695
    %v1306 = vpow.pop %v1305
    %v1307 = vmul.f32 %v1304, 1.442695
    %v1308 = vpow.pop %v1307
    %v1309 = vadd.f32 %v1306, 1.0
    %v1310 = vadd.f32 %v1308, 1.0
    %v1311 = vrcp.pop %v1309
    %v1312 = vmul.f32 1.0, %v1311
    %v1313 = vrcp.pop %v1310
    %v1314 = vmul.f32 1.0, %v1313
    %v1315 = vmul.f32 %v1312, %v43
    %v1316 = vmul.f32 %v1314, %v44
    %v1317 = vld [vmem:[%s2] sm:$0xf]
    %v1318 = vld [vmem:[%s2 + $0x4] sm:$0xf]
    %v1319 = vld [vmem:[%s7] sm:$0xf]
    %v1320 = vld [vmem:[%s7 + $0x4] sm:$0xf]
    %v1321 = vld [vmem:[%s7 + $0x8] sm:$0xf]
    %v1322 = vld [vmem:[%s7 + $0xc] sm:$0xf]
    %v1323 = vpack.c.bf16 %v1316, %v1315
    %v1324 = vld [vmem:[%s8] sm:$0xf]
    %v1325 = vld [vmem:[%s8 + $0x4] sm:$0xf]
    %v1326 = vld [vmem:[%s8 + $0x8] sm:$0xf]
    %v1327 = vld [vmem:[%s8 + $0xc] sm:$0xf]
    %v1332 = vunpack.c.l.b16 %v1324
    %v1333 = vunpack.c.l.b16 %v1325
    %v1334 = vunpack.c.l.b16 %v1326
    %v1335 = vunpack.c.l.b16 %v1327
    %v1336 = vpack.c.b16 %v1333, %v1332
    %v1337 = vpack.c.b16 %v1335, %v1334
    %v1341 = vsel %vm149, %v1323, 0
    %1343 = vmatprep.subr.bf16.mxu0 0
    %1344 = vmatpush1.bf16.msra.mxu0 %v1336
    %1345 = vmatprep.subr.bf16.mxu0 0
    %1346 = vmatpush1.bf16.msra.mxu0 %v1337
    %1347 = vmatprep.subr.bf16.mxu0 0
    %1348 = vmatpush1.bf16.msra.mxu0 0
    %1349 = vmatprep.subr.bf16.mxu0 0
    %1350 = vmatpush1.bf16.msra.mxu0 0
    %1351 = vmatprep.subr.bf16.mxu0 0
    %1352 = vmatpush1.bf16.msra.mxu0 0
    %1353 = vmatprep.subr.bf16.mxu0 0
    %1354 = vmatpush1.bf16.msra.mxu0 0
    %1355 = vmatprep.subr.bf16.mxu0 0
    %1356 = vmatpush1.bf16.msra.mxu0 0
    %1357 = vmatprep.subr.bf16.mxu0 0
    %1358 = vmatpush1.bf16.msra.mxu0 0
    %1359 = vmatprep.subr.bf16.mxu0 0
    %1360 = vmatpush1.bf16.msra.mxu0 0
    %1361 = vmatprep.subr.bf16.mxu0 0
    %1362 = vmatpush1.bf16.msra.mxu0 0
    %1363 = vmatprep.subr.bf16.mxu0 0
    %1364 = vmatpush1.bf16.msra.mxu0 0
    %1365 = vmatprep.subr.bf16.mxu0 0
    %1366 = vmatpush1.bf16.msra.mxu0 0
    %1367 = vmatprep.subr.bf16.mxu0 0
    %1368 = vmatpush1.bf16.msra.mxu0 0
    %1369 = vmatprep.subr.bf16.mxu0 0
    %1370 = vmatpush1.bf16.msra.mxu0 0
    %1371 = vmatprep.subr.bf16.mxu0 0
    %1372 = vmatpush1.bf16.msra.mxu0 0
    %1373 = vmatprep.subr.bf16.mxu0 0
    %1374 = vmatpush1.bf16.msra.mxu0 0
    %1375 = vmatprep.mubr.bf16.mxu0 0
    %1376 = vmatmul.mubr.bf16.gmra.mrb[0].mxu0 %v1341
    %v1377 = vpop.f32.mrb[0].mxu0
    %v1378 = vadd.f32 0.0, %v1377
    %v1379 = vpop.f32.mrb[0].mxu0
    %v1380 = vpop.f32.mrb[0].mxu0
    %v1381 = vadd.f32 0.0, %v1380
    %v1382 = vpop.f32.mrb[0].mxu0
    %1383 = vdwg.mxu0
    %v1386 = vunpack.c.l.b16 %v1317
    %v1387 = vunpack.c.l.b16 %v1318
    %v1388 = vpack.c.b16 %v1387, %v1386
    %v1393 = vunpack.c.l.b16 %v1319
    %v1394 = vunpack.c.l.b16 %v1320
    %v1395 = vunpack.c.l.b16 %v1321
    %v1396 = vunpack.c.l.b16 %v1322
    %v1397 = vpack.c.b16 %v1394, %v1393
    %v1398 = vpack.c.b16 %v1396, %v1395
    %v1402 = vsel %vm149, %v1388, 0
    %1404 = vmatprep.subr.bf16.mxu0 0
    %1405 = vmatpush1.bf16.msra.mxu0 %v1397
    %1406 = vmatprep.subr.bf16.mxu0 0
    %1407 = vmatpush1.bf16.msra.mxu0 %v1398
    %1408 = vmatprep.subr.bf16.mxu0 0
    %1409 = vmatpush1.bf16.msra.mxu0 0
    %1410 = vmatprep.subr.bf16.mxu0 0
    %1411 = vmatpush1.bf16.msra.mxu0 0
    %1412 = vmatprep.subr.bf16.mxu0 0
    %1413 = vmatpush1.bf16.msra.mxu0 0
    %1414 = vmatprep.subr.bf16.mxu0 0
    %1415 = vmatpush1.bf16.msra.mxu0 0
    %1416 = vmatprep.subr.bf16.mxu0 0
    %1417 = vmatpush1.bf16.msra.mxu0 0
    %1418 = vmatprep.subr.bf16.mxu0 0
    %1419 = vmatpush1.bf16.msra.mxu0 0
    %1420 = vmatprep.subr.bf16.mxu0 0
    %1421 = vmatpush1.bf16.msra.mxu0 0
    %1422 = vmatprep.subr.bf16.mxu0 0
    %1423 = vmatpush1.bf16.msra.mxu0 0
    %1424 = vmatprep.subr.bf16.mxu0 0
    %1425 = vmatpush1.bf16.msra.mxu0 0
    %1426 = vmatprep.subr.bf16.mxu0 0
    %1427 = vmatpush1.bf16.msra.mxu0 0
    %1428 = vmatprep.subr.bf16.mxu0 0
    %1429 = vmatpush1.bf16.msra.mxu0 0
    %1430 = vmatprep.subr.bf16.mxu0 0
    %1431 = vmatpush1.bf16.msra.mxu0 0
    %1432 = vmatprep.subr.bf16.mxu0 0
    %1433 = vmatpush1.bf16.msra.mxu0 0
    %1434 = vmatprep.subr.bf16.mxu0 0
    %1435 = vmatpush1.bf16.msra.mxu0 0
    %1436 = vmatprep.mubr.bf16.mxu0 0
    %1437 = vmatmul.mubr.bf16.gmra.mrb[0].mxu0 %v1402
    %v1438 = vpop.f32.mrb[0].mxu0
    %v1439 = vadd.f32 %v1378, %v1438
    %v1440 = vpop.f32.mrb[0].mxu0
    %v1441 = vpop.f32.mrb[0].mxu0
    %v1442 = vadd.f32 %v1381, %v1441
    %v1443 = vpop.f32.mrb[0].mxu0
    %1444 = vdwg.mxu0
    %v1445 = vld [vmem:[%s9] sm:$0x1]
    %v1447 = vlaneseq
    %v1448 = vshrl.u32 %v1447, 7
    %v1449 = vsub.s32 0, %v1448
    %v1450 = vrot.slane %v1445, %v1449
    %v1452 = vadd.f32 %v1439, %v1450
    %v1453 = vadd.f32 %v1442, %v1450
    %v1454 = vxor.u32 %v1452, 2147483648
    %v1455 = vxor.u32 %v1453, 2147483648
    %v1456 = vmul.f32 %v1454, 1.442695
    %v1457 = vpow.pop %v1456
    %v1458 = vmul.f32 %v1455, 1.442695
    %v1459 = vpow.pop %v1458
    %v1460 = vadd.f32 %v1457, 1.0
    %v1461 = vadd.f32 %v1459, 1.0
    %v1462 = vrcp.pop %v1460
    %v1463 = vmul.f32 1.0, %v1462
    %v1464 = vrcp.pop %v1461
    %v1465 = vmul.f32 1.0, %v1464
    %v1466 = vsel %vm149, %v1463, 0.0
    %1467 = vadd.xlane.f32.xlu0 %v1466
    %v1468 = vpop.xlane.xlu0 %1467
    %v1469 = vsel %vm149, %v1465, 0.0
    %1470 = vadd.xlane.f32.xlu0 %v1469
    %v1471 = vpop.xlane.xlu0 %1470
    %v1472 = vrcp.pop 32.0
    %v1473 = vmul.f32 %v1468, %v1472
    %v1474 = vmul.f32 %v1471, %v1472
    %v1475 = vsub.f32 %v1463, %v1473
    %v1476 = vsub.f32 %v1465, %v1474
    %v1477 = vmul.f32 %v1475, %v1475
    %v1478 = vmul.f32 %v1476, %v1476
    %v1479 = vsel %vm149, %v1477, 0.0
    %1480 = vadd.xlane.f32.xlu0 %v1479
    %v1481 = vpop.xlane.xlu0 %1480
    %v1482 = vsel %vm149, %v1478, 0.0
    %1483 = vadd.xlane.f32.xlu0 %v1482
    %v1484 = vpop.xlane.xlu0 %1483
    %v1485 = vmul.f32 %v1481, %v1472
    %v1486 = vmul.f32 %v1484, %v1472
    %v1487 = vadd.f32 %v1485, 0.0
    %v1488 = vadd.f32 %v1486, 0.0
    %v1489 = vrsqrt.pop %v1487
    %v1490 = vrsqrt.pop %v1488
    %v1491 = vmul.f32 %v1475, %v1489
    %v1492 = vmul.f32 %v1476, %v1490
    %v1493 = vld [vmem:[%s10] sm:$0x1]
    %v1495 = vlaneseq
    %v1496 = vshrl.u32 %v1495, 7
    %v1497 = vsub.s32 0, %v1496
    %v1498 = vrot.slane %v1493, %v1497
    %v1500 = vmul.f32 %v1491, %v1498
    %v1501 = vmul.f32 %v1492, %v1498
    %v1502 = vld [vmem:[%s11] sm:$0x1]
    %v1504 = vlaneseq
    %v1505 = vshrl.u32 %v1504, 7
    %v1506 = vsub.s32 0, %v1505
    %v1507 = vrot.slane %v1502, %v1506
    %v1509 = vadd.f32 %v1500, %v1507
    %v1510 = vadd.f32 %v1501, %v1507
    %1511 = vst.msk [vmem:[#allocation2] sm:$0xff] %vm149, %v1509
    %1512 = vst.msk [vmem:[#allocation2 + $0x8] sm:$0xff] %vm149, %v1510
    // Predicated region
    $region50: #{tpu_custom_call.1} parent=1 // pred_check
      _
    $region51: #{tpu_custom_call.1} parent=1 // pred_check_branch
      %1514 = sbr.rel (0) target = $region53
    $region52: #{tpu_custom_call.1} parent=1 // pred_region
      %s1516 = ssub.s32 256, 256
      %1517 = vsyncadd [#allocation3], %s1516
      %s1518 = sshll.u32 [#allocation2], 4
      %s1519 = int_to_ptr.vmem [resolvable:$true] %s1518
      %1524 = dma.vmem_to_hbm [thread:$0]  %s1519, 256, %s12, [#allocation3], 128, 128, 8
    $region53: #{tpu_custom_call.1} parent=1 // pred_fallthru
      _
    // Predicated region
    $region54: #{tpu_custom_call.1} parent=1 // pred_check
      _
    $region55: #{tpu_custom_call.1} parent=1 // pred_check_branch
      %1526 = sbr.rel (0) target = $region57
    $region56: #{tpu_custom_call.1} parent=1 // pred_region
      %1527 = dma.done [#allocation3], 256
    $region57: #{tpu_custom_call.1} parent=1 // pred_fallthru
      _
    %1528 = vsyncpa [#allocation3], 1

</llo_original>
